<compile_context>
chip_gen: v6e
topology: v6e:2x2x1
jax: 0.10.0
libtpu: 0.0.40
codegen_flags: <defaults>
</compile_context>

<pallas_src>
import functools

import jax
import jax.numpy as jnp
import numpy as np
from jax.experimental import pallas as pl
from jax.experimental.pallas import tpu as pltpu


# ----------------------------------------------------------------------------
# Fused DACBlock kernel (one batch element per grid step, everything in VMEM)
# ----------------------------------------------------------------------------
def _dac_kernel(x_ref, mask_ref, w1_ref, w2_ref, w3_ref, wc_ref,
                b1_ref, b2_ref, b3_ref, bc_ref, o_ref,
                xp_ref, col_ref, abc_ref,
                *, CP, RSP, WP, BASE, HALO):
    # x_ref   : (1, CP, RSP) f32   input in padded-flat layout (pad cols/tail == 0)
    # mask_ref: (1, RSP)     f32   1.0 at real-pixel positions, 0.0 at padding
    # w*_ref  : (CP, 9*CP)   bf16  3x3 weights, im2col layout [cout, tap*CP + cin]
    # wc_ref  : (CP, CP)     bf16  1x1 weights (Cout, Cin)
    # b*_ref  : (CP, 1)      f32   biases
    # o_ref   : (1, CP, RSP) f32   output, same padded-flat layout
    # xp_ref  : (CP, LTOT)   bf16  scratch: zero halos | interior frame
    # col_ref : (9*CP, RSP)  bf16  im2col scratch (9 shifted windows, tap-major)
    # abc_ref : (CP, 3*RSP)  bf16  lane-concatenated inputs of the fused 1x1
    f32, bf16 = jnp.float32, jnp.bfloat16
    x = x_ref[0]                              # (CP, RSP) f32
    mask = mask_ref[...]                      # (1, RSP)  f32

    # Zero only the halo regions ever read by the conv taps; the interior
    # [BASE, BASE+RSP) is fully (re)written before every conv, everything
    # else in xp_ref is never read.
    xp_ref[:, BASE - HALO:BASE] = jnp.zeros((CP, HALO), bf16)
    xp_ref[:, BASE + RSP:BASE + RSP + HALO] = jnp.zeros((CP, HALO), bf16)

    def conv3x3(w_ref, b_ref, d):
        # Dilated 3x3 conv of whatever currently sits in xp_ref, as im2col:
        # copy the 9 shifted windows (the only unaligned accesses) into the
        # aligned col scratch once, then a single bf16 MXU matmul with K=9*CP.
        for t in range(9):
            ky, kx = divmod(t, 3)
            off = BASE + (ky - 1) * d * WP + (kx - 1) * d
            col_ref[t * CP:(t + 1) * CP, :] = xp_ref[:, off:off + RSP]
        y = jnp.dot(w_ref[...], col_ref[...], preferred_element_type=f32)
        return y + b_ref[...]                                  # (CP, RSP) f32

    # ---- branch pipeline (intermediates never leave VMEM) -------------------
    xp_ref[:, BASE:BASE + RSP] = x.astype(bf16)  # x already has zero pad cols
    y1 = conv3x3(w1_ref, b1_ref, 1)              # dilate1(x)            (pre-ReLU)
    a = conv3x3(w2_ref, b2_ref, 3)               # dilate2(x)
    abc_ref[:, 0:RSP] = a.astype(bf16)

    out = x + jnp.maximum(y1, 0.0)               # residual + branch d1 (f32)

    # Invariant: re-mask (zero pad cols / tail) before every xp_ref reuse.
    xp_ref[:, BASE:BASE + RSP] = (y1 * mask).astype(bf16)
    bb = conv3x3(w2_ref, b2_ref, 3)              # dilate2(dilate1(x))
    abc_ref[:, RSP:2 * RSP] = bb.astype(bf16)

    xp_ref[:, BASE:BASE + RSP] = (bb * mask).astype(bf16)
    c = conv3x3(w3_ref, b3_ref, 5)               # dilate3(dilate2(dilate1(x)))
    abc_ref[:, 2 * RSP:3 * RSP] = c.astype(bf16)

    # Branches d2/d3/d4: three 1x1 convs fused into ONE bf16 MXU matmul over
    # 3*RSP lanes, then one bias + ReLU, then the residual sum (f32, VPU).
    y = jnp.dot(wc_ref[...], abc_ref[...], preferred_element_type=f32) + bc_ref[...]
    y = jnp.maximum(y, 0.0)
    o_ref[0] = out + y[:, 0:RSP] + y[:, RSP:2 * RSP] + y[:, 2 * RSP:3 * RSP]


# ----------------------------------------------------------------------------
# Wrapper: layout plumbing + single pallas_call
# ----------------------------------------------------------------------------
def dac_block(x, params):
    """DACBlock forward.  x: (N, C, H, W) float32 -> (N, C, H, W) float32."""
    N, C, H, W = x.shape
    PMAX = 5                              # max dilation among dilate1/2/3
    WP = W + 2 * PMAX                     # row width incl. zero pad columns
    RS = H * WP                           # flat length of the H interior rows
    RSP = ((RS + 127) // 128) * 128       # lane-aligned row span (512 for 16x16)
    HALO = PMAX * (WP + 1)                # worst-case |tap shift| = d*WP + d
    BASE = HALO + PMAX * WP               # scratch offset of interior row 0
    LTOT = ((BASE + RSP + HALO + 127) // 128) * 128
    CP = max(8, ((C + 7) // 8) * 8)       # sublane-pad the channel dim

    # VMEM OOB has no runtime check: make sure the halo covers every tap.
    for d in (1, 3, 5):
        assert d * (WP + 1) <= HALO, "dilation exceeds halo/guard size"
    assert BASE - HALO >= 0 and BASE + RSP + HALO <= LTOT

    w1, b1 = params["dilate1"]
    w2, b2 = params["dilate2"]
    w3, b3 = params["dilate3"]
    wc, bc = params["conv1x1"]

    def prep3(w):   # OIHW (C,C,3,3) -> (CP, 9*CP) bf16 im2col [cout, t*CP+cin]
        wp = jnp.zeros((CP, CP, 3, 3), jnp.float32).at[:C, :C].set(
            w.astype(jnp.float32))
        return jnp.transpose(wp, (0, 2, 3, 1)).reshape(CP, 9 * CP).astype(
            jnp.bfloat16)

    def prep1(w):   # (C,C,1,1) -> (CP, CP) bf16
        wp = jnp.zeros((CP, CP), jnp.float32).at[:C, :C].set(
            w.reshape(C, C).astype(jnp.float32))
        return wp.astype(jnp.bfloat16)

    def prepb(b):   # (C,) -> (CP, 1) f32
        return jnp.zeros((CP, 1), jnp.float32).at[:C, 0].set(
            b.astype(jnp.float32))

    w1k, w2k, w3k, wck = prep3(w1), prep3(w2), prep3(w3), prep1(wc)
    b1k, b2k, b3k, bck = prepb(b1), prepb(b2), prepb(b3), prepb(bc)

    # Input -> lane-dense padded-flat layout (single cheap XLA pad of x).
    xw = jnp.pad(x.astype(jnp.float32),
                 ((0, 0), (0, CP - C), (0, 0), (PMAX, PMAX)))
    xin = jnp.pad(xw.reshape(N, CP, RS), ((0, 0), (0, 0), (0, RSP - RS)))

    # 1.0 where a flat position is a real pixel, 0.0 on padding columns / tail.
    pos = np.arange(RSP)
    mask_np = (pos < RS) & (pos % WP >= PMAX) & (pos % WP < PMAX + W)
    mask = jnp.asarray(mask_np.astype(np.float32)).reshape(1, RSP)

    kernel = functools.partial(_dac_kernel, CP=CP, RSP=RSP, WP=WP,
                               BASE=BASE, HALO=HALO)

    def _full(shape):
        return pl.BlockSpec(shape, lambda n: (0,) * len(shape))

    out_flat = pl.pallas_call(
        kernel,
        out_shape=jax.ShapeDtypeStruct((N, CP, RSP), jnp.float32),
        grid=(N,),
        in_specs=[
            pl.BlockSpec((1, CP, RSP), lambda n: (n, 0, 0)),        # x
            _full((1, RSP)),                                        # mask
            _full((CP, 9 * CP)), _full((CP, 9 * CP)), _full((CP, 9 * CP)),
            _full((CP, CP)),                                        # 1x1 weight
            _full((CP, 1)), _full((CP, 1)), _full((CP, 1)), _full((CP, 1)),
        ],
        out_specs=pl.BlockSpec((1, CP, RSP), lambda n: (n, 0, 0)),
        scratch_shapes=[
            pltpu.VMEM((CP, LTOT), jnp.bfloat16),      # padded frame
            pltpu.VMEM((9 * CP, RSP), jnp.bfloat16),   # im2col windows
            pltpu.VMEM((CP, 3 * RSP), jnp.bfloat16),   # fused-1x1 operand
        ],
        compiler_params=pltpu.CompilerParams(
            dimension_semantics=("parallel",),          # batch -> v7x TC sharding
            vmem_limit_bytes=64 * 1024 * 1024),
    )(xin, mask, w1k, w2k, w3k, wck, b1k, b2k, b3k, bck)

    # Drop channel padding, padding columns / tail and restore NCHW.
    return out_flat[:, :C, :RS].reshape(N, C, H, WP)[:, :, :, PMAX:PMAX + W]


# ----------------------------------------------------------------------------
# Parameter init (xavier_uniform_, zero bias) and pure-JAX reference
# ----------------------------------------------------------------------------
def xavier_uniform(key, shape):
    fan_in = shape[1] * shape[2] * shape[3]
    fan_out = shape[0] * shape[2] * shape[3]
    bound = float(np.sqrt(6.0 / (fan_in + fan_out)))
    return jax.random.uniform(key, shape, jnp.float32, -bound, bound)


def make_params(key, channel):
    keys = jax.random.split(key, 4)
    p = {}
    for name, k, ks in zip(["dilate1", "dilate2", "dilate3", "conv1x1"],
                           keys, [3, 3, 3, 1]):
        w = xavier_uniform(k, (channel, channel, ks, ks))
        b = jnp.zeros((channel,), jnp.float32)
        p[name] = (w, b)
    return p


def _conv_ref(x, w, b, dilation, padding):
    y = jax.lax.conv_general_dilated(
        x, w, window_strides=(1, 1),
        padding=[(padding, padding), (padding, padding)],
        rhs_dilation=(dilation, dilation),
        dimension_numbers=("NCHW", "OIHW", "NCHW"))
    return y + b.reshape(1, -1, 1, 1)


def dac_block_ref(x, params):
    w1, b1 = params["dilate1"]
    w2, b2 = params["dilate2"]
    w3, b3 = params["dilate3"]
    wc, bc = params["conv1x1"]
    relu = jax.nn.relu
    y1 = _conv_ref(x, w1, b1, 1, 1)
    d1 = relu(y1)
    d2 = relu(_conv_ref(_conv_ref(x, w2, b2, 3, 3), wc, bc, 1, 0))
    bb = _conv_ref(y1, w2, b2, 3, 3)
    d3 = relu(_conv_ref(bb, wc, bc, 1, 0))
    d4 = relu(_conv_ref(_conv_ref(bb, w3, b3, 5, 5), wc, bc, 1, 0))
    return x + d1 + d2 + d3 + d4


if __name__ == "__main__":
    key = jax.random.PRNGKey(0)
    k_x, k_p = jax.random.split(key)

    N, C, H, W = 2, 4, 16, 16
    x = jax.random.normal(k_x, (N, C, H, W), jnp.float32)
    params = make_params(k_p, C)

    out = jax.jit(dac_block)(x, params)
    out = jax.block_until_ready(out)

    ref = dac_block_ref(x, params)
    assert out.shape == (N, C, H, W) and out.dtype == jnp.float32
    # Tolerance is intentional: the kernel runs all matmuls in bf16 on the
    # MXU (weights + chained intermediates cast to bf16); typical agreement
    # with the f32 reference is ~1e-3.
    np.testing.assert_allclose(np.asarray(out), np.asarray(ref),
                               rtol=2e-2, atol=2e-2)
    print("KERNEL_OK")
</pallas_src>

<mosaic_0001>
module attributes {stable_mosaic.version = 11 : i64} {
  func.func @_dac_kernel(%arg0: i32, %arg1: memref<1x8x512xf32, #tpu.memory_space<vmem>>, %arg2: memref<1x512xf32, #tpu.memory_space<vmem>>, %arg3: memref<8x72xbf16, #tpu.memory_space<vmem>>, %arg4: memref<8x72xbf16, #tpu.memory_space<vmem>>, %arg5: memref<8x72xbf16, #tpu.memory_space<vmem>>, %arg6: memref<8x8xbf16, #tpu.memory_space<vmem>>, %arg7: memref<8x1xf32, #tpu.memory_space<vmem>>, %arg8: memref<8x1xf32, #tpu.memory_space<vmem>>, %arg9: memref<8x1xf32, #tpu.memory_space<vmem>>, %arg10: memref<8x1xf32, #tpu.memory_space<vmem>>, %arg11: memref<1x8x512xf32, #tpu.memory_space<vmem>>, %arg12: memref<8x1024xbf16, #tpu.memory_space<vmem>>, %arg13: memref<72x512xbf16, #tpu.memory_space<vmem>>, %arg14: memref<8x1536xbf16, #tpu.memory_space<vmem>>) attributes {dimension_semantics = [#tpu.dimension_semantics<parallel>], iteration_bounds = array<i64: 2>, scalar_prefetch = 0 : i64, scratch_operands = 3 : i64, tpu.core_type = #tpu.core_type<tc>, window_params = [{transform_indices = @transform_0, window_bounds = array<i64: 1, 8, 512>}, {pipeline_mode = #tpu.pipeline_mode<synchronous>, transform_indices = @transform_1, window_bounds = array<i64: 1, 512>}, {pipeline_mode = #tpu.pipeline_mode<synchronous>, transform_indices = @transform_2, window_bounds = array<i64: 8, 72>}, {pipeline_mode = #tpu.pipeline_mode<synchronous>, transform_indices = @transform_3, window_bounds = array<i64: 8, 72>}, {pipeline_mode = #tpu.pipeline_mode<synchronous>, transform_indices = @transform_4, window_bounds = array<i64: 8, 72>}, {pipeline_mode = #tpu.pipeline_mode<synchronous>, transform_indices = @transform_5, window_bounds = array<i64: 8, 8>}, {pipeline_mode = #tpu.pipeline_mode<synchronous>, transform_indices = @transform_6, window_bounds = array<i64: 8, 1>}, {pipeline_mode = #tpu.pipeline_mode<synchronous>, transform_indices = @transform_7, window_bounds = array<i64: 8, 1>}, {pipeline_mode = #tpu.pipeline_mode<synchronous>, transform_indices = @transform_8, window_bounds = array<i64: 8, 1>}, {pipeline_mode = #tpu.pipeline_mode<synchronous>, transform_indices = @transform_9, window_bounds = array<i64: 8, 1>}, {transform_indices = @transform_10, window_bounds = array<i64: 1, 8, 512>}]} {
    %c0 = arith.constant 0 : index
    %c0_0 = arith.constant 0 : index
    %c0_1 = arith.constant 0 : index
    %0 = vector.load %arg1[%c0, %c0_0, %c0_1] : memref<1x8x512xf32, #tpu.memory_space<vmem>>, vector<1x8x512xf32>
    %1 = vector.shape_cast %0 : vector<1x8x512xf32> to vector<8x512xf32>
    %c0_2 = arith.constant 0 : index
    %c0_3 = arith.constant 0 : index
    %2 = vector.load %arg2[%c0_2, %c0_3] : memref<1x512xf32, #tpu.memory_space<vmem>>, vector<1x512xf32>
    %cst = arith.constant 0.000000e+00 : bf16
    %3 = vector.broadcast %cst : bf16 to vector<8x135xbf16>
    %c0_4 = arith.constant 0 : index
    %c130 = arith.constant 130 : index
    %4 = vector.load %arg12[%c0_4, %c130] : memref<8x1024xbf16, #tpu.memory_space<vmem>>, vector<8x135xbf16>
    tpu.vector_store %arg12[%c0_4, %c130], %3 {strides = array<i32>} : memref<8x1024xbf16, #tpu.memory_space<vmem>>, vector<8x135xbf16>,
    %cst_5 = arith.constant 0.000000e+00 : bf16
    %5 = vector.broadcast %cst_5 : bf16 to vector<8x135xbf16>
    %c0_6 = arith.constant 0 : index
    %c777 = arith.constant 777 : index
    %6 = vector.load %arg12[%c0_6, %c777] : memref<8x1024xbf16, #tpu.memory_space<vmem>>, vector<8x135xbf16>
    tpu.vector_store %arg12[%c0_6, %c777], %5 {strides = array<i32>} : memref<8x1024xbf16, #tpu.memory_space<vmem>>, vector<8x135xbf16>,
    %7 = arith.truncf %1 : vector<8x512xf32> to vector<8x512xbf16>
    %c0_7 = arith.constant 0 : index
    %c265 = arith.constant 265 : index
    %8 = vector.load %arg12[%c0_7, %c265] : memref<8x1024xbf16, #tpu.memory_space<vmem>>, vector<8x512xbf16>
    tpu.vector_store %arg12[%c0_7, %c265], %7 {strides = array<i32>} : memref<8x1024xbf16, #tpu.memory_space<vmem>>, vector<8x512xbf16>,
    %c0_8 = arith.constant 0 : index
    %c238 = arith.constant 238 : index
    %9 = vector.load %arg12[%c0_8, %c238] : memref<8x1024xbf16, #tpu.memory_space<vmem>>, vector<8x512xbf16>
    %c0_9 = arith.constant 0 : index
    %c0_10 = arith.constant 0 : index
    %10 = vector.load %arg13[%c0_9, %c0_10] : memref<72x512xbf16, #tpu.memory_space<vmem>>, vector<8x512xbf16>
    tpu.vector_store %arg13[%c0_9, %c0_10], %9 {strides = array<i32>} : memref<72x512xbf16, #tpu.memory_space<vmem>>, vector<8x512xbf16>,
    %c0_11 = arith.constant 0 : index
    %c239 = arith.constant 239 : index
    %11 = vector.load %arg12[%c0_11, %c239] : memref<8x1024xbf16, #tpu.memory_space<vmem>>, vector<8x512xbf16>
    %c8 = arith.constant 8 : index
    %c0_12 = arith.constant 0 : index
    %12 = vector.load %arg13[%c8, %c0_12] : memref<72x512xbf16, #tpu.memory_space<vmem>>, vector<8x512xbf16>
    tpu.vector_store %arg13[%c8, %c0_12], %11 {strides = array<i32>} : memref<72x512xbf16, #tpu.memory_space<vmem>>, vector<8x512xbf16>,
    %c0_13 = arith.constant 0 : index
    %c240 = arith.constant 240 : index
    %13 = vector.load %arg12[%c0_13, %c240] : memref<8x1024xbf16, #tpu.memory_space<vmem>>, vector<8x512xbf16>
    %c16 = arith.constant 16 : index
    %c0_14 = arith.constant 0 : index
    %14 = vector.load %arg13[%c16, %c0_14] : memref<72x512xbf16, #tpu.memory_space<vmem>>, vector<8x512xbf16>
    tpu.vector_store %arg13[%c16, %c0_14], %13 {strides = array<i32>} : memref<72x512xbf16, #tpu.memory_space<vmem>>, vector<8x512xbf16>,
    %c0_15 = arith.constant 0 : index
    %c264 = arith.constant 264 : index
    %15 = vector.load %arg12[%c0_15, %c264] : memref<8x1024xbf16, #tpu.memory_space<vmem>>, vector<8x512xbf16>
    %c24 = arith.constant 24 : index
    %c0_16 = arith.constant 0 : index
    %16 = vector.load %arg13[%c24, %c0_16] : memref<72x512xbf16, #tpu.memory_space<vmem>>, vector<8x512xbf16>
    tpu.vector_store %arg13[%c24, %c0_16], %15 {strides = array<i32>} : memref<72x512xbf16, #tpu.memory_space<vmem>>, vector<8x512xbf16>,
    %c0_17 = arith.constant 0 : index
    %c265_18 = arith.constant 265 : index
    %17 = vector.load %arg12[%c0_17, %c265_18] : memref<8x1024xbf16, #tpu.memory_space<vmem>>, vector<8x512xbf16>
    %c32 = arith.constant 32 : index
    %c0_19 = arith.constant 0 : index
    %18 = vector.load %arg13[%c32, %c0_19] : memref<72x512xbf16, #tpu.memory_space<vmem>>, vector<8x512xbf16>
    tpu.vector_store %arg13[%c32, %c0_19], %17 {strides = array<i32>} : memref<72x512xbf16, #tpu.memory_space<vmem>>, vector<8x512xbf16>,
    %c0_20 = arith.constant 0 : index
    %c266 = arith.constant 266 : index
    %19 = vector.load %arg12[%c0_20, %c266] : memref<8x1024xbf16, #tpu.memory_space<vmem>>, vector<8x512xbf16>
    %c40 = arith.constant 40 : index
    %c0_21 = arith.constant 0 : index
    %20 = vector.load %arg13[%c40, %c0_21] : memref<72x512xbf16, #tpu.memory_space<vmem>>, vector<8x512xbf16>
    tpu.vector_store %arg13[%c40, %c0_21], %19 {strides = array<i32>} : memref<72x512xbf16, #tpu.memory_space<vmem>>, vector<8x512xbf16>,
    %c0_22 = arith.constant 0 : index
    %c290 = arith.constant 290 : index
    %21 = vector.load %arg12[%c0_22, %c290] : memref<8x1024xbf16, #tpu.memory_space<vmem>>, vector<8x512xbf16>
    %c48 = arith.constant 48 : index
    %c0_23 = arith.constant 0 : index
    %22 = vector.load %arg13[%c48, %c0_23] : memref<72x512xbf16, #tpu.memory_space<vmem>>, vector<8x512xbf16>
    tpu.vector_store %arg13[%c48, %c0_23], %21 {strides = array<i32>} : memref<72x512xbf16, #tpu.memory_space<vmem>>, vector<8x512xbf16>,
    %c0_24 = arith.constant 0 : index
    %c291 = arith.constant 291 : index
    %23 = vector.load %arg12[%c0_24, %c291] : memref<8x1024xbf16, #tpu.memory_space<vmem>>, vector<8x512xbf16>
    %c56 = arith.constant 56 : index
    %c0_25 = arith.constant 0 : index
    %24 = vector.load %arg13[%c56, %c0_25] : memref<72x512xbf16, #tpu.memory_space<vmem>>, vector<8x512xbf16>
    tpu.vector_store %arg13[%c56, %c0_25], %23 {strides = array<i32>} : memref<72x512xbf16, #tpu.memory_space<vmem>>, vector<8x512xbf16>,
    %c0_26 = arith.constant 0 : index
    %c292 = arith.constant 292 : index
    %25 = vector.load %arg12[%c0_26, %c292] : memref<8x1024xbf16, #tpu.memory_space<vmem>>, vector<8x512xbf16>
    %c64 = arith.constant 64 : index
    %c0_27 = arith.constant 0 : index
    %26 = vector.load %arg13[%c64, %c0_27] : memref<72x512xbf16, #tpu.memory_space<vmem>>, vector<8x512xbf16>
    tpu.vector_store %arg13[%c64, %c0_27], %25 {strides = array<i32>} : memref<72x512xbf16, #tpu.memory_space<vmem>>, vector<8x512xbf16>,
    %c0_28 = arith.constant 0 : index
    %c0_29 = arith.constant 0 : index
    %27 = vector.load %arg3[%c0_28, %c0_29] : memref<8x72xbf16, #tpu.memory_space<vmem>>, vector<8x72xbf16>
    %c0_30 = arith.constant 0 : index
    %c0_31 = arith.constant 0 : index
    %28 = vector.load %arg13[%c0_30, %c0_31] : memref<72x512xbf16, #tpu.memory_space<vmem>>, vector<72x512xbf16>
    %cst_32 = arith.constant dense<0.000000e+00> : vector<8x512xf32>
    %29 = tpu.matmul %27, %28, %cst_32 {dimension_numbers = #tpu.dot_dimension_numbers<[1], [0], [0], [1], [0, 0, 1, 1], [], []>} : vector<8x72xbf16>, vector<72x512xbf16>, vector<8x512xf32> -> vector<8x512xf32>
    %c0_33 = arith.constant 0 : index
    %c0_34 = arith.constant 0 : index
    %30 = vector.load %arg7[%c0_33, %c0_34] : memref<8x1xf32, #tpu.memory_space<vmem>>, vector<8x1xf32>
    %31 = vector.broadcast %30 : vector<8x1xf32> to vector<8x512xf32>
    %32 = arith.addf %29, %31 : vector<8x512xf32>
    %c0_35 = arith.constant 0 : index
    %c184 = arith.constant 184 : index
    %33 = vector.load %arg12[%c0_35, %c184] : memref<8x1024xbf16, #tpu.memory_space<vmem>>, vector<8x512xbf16>
    %c0_36 = arith.constant 0 : index
    %c0_37 = arith.constant 0 : index
    %34 = vector.load %arg13[%c0_36, %c0_37] : memref<72x512xbf16, #tpu.memory_space<vmem>>, vector<8x512xbf16>
    tpu.vector_store %arg13[%c0_36, %c0_37], %33 {strides = array<i32>} : memref<72x512xbf16, #tpu.memory_space<vmem>>, vector<8x512xbf16>,
    %c0_38 = arith.constant 0 : index
    %c187 = arith.constant 187 : index
    %35 = vector.load %arg12[%c0_38, %c187] : memref<8x1024xbf16, #tpu.memory_space<vmem>>, vector<8x512xbf16>
    %c8_39 = arith.constant 8 : index
    %c0_40 = arith.constant 0 : index
    %36 = vector.load %arg13[%c8_39, %c0_40] : memref<72x512xbf16, #tpu.memory_space<vmem>>, vector<8x512xbf16>
    tpu.vector_store %arg13[%c8_39, %c0_40], %35 {strides = array<i32>} : memref<72x512xbf16, #tpu.memory_space<vmem>>, vector<8x512xbf16>,
    %c0_41 = arith.constant 0 : index
    %c190 = arith.constant 190 : index
    %37 = vector.load %arg12[%c0_41, %c190] : memref<8x1024xbf16, #tpu.memory_space<vmem>>, vector<8x512xbf16>
    %c16_42 = arith.constant 16 : index
    %c0_43 = arith.constant 0 : index
    %38 = vector.load %arg13[%c16_42, %c0_43] : memref<72x512xbf16, #tpu.memory_space<vmem>>, vector<8x512xbf16>
    tpu.vector_store %arg13[%c16_42, %c0_43], %37 {strides = array<i32>} : memref<72x512xbf16, #tpu.memory_space<vmem>>, vector<8x512xbf16>,
    %c0_44 = arith.constant 0 : index
    %c262 = arith.constant 262 : index
    %39 = vector.load %arg12[%c0_44, %c262] : memref<8x1024xbf16, #tpu.memory_space<vmem>>, vector<8x512xbf16>
    %c24_45 = arith.constant 24 : index
    %c0_46 = arith.constant 0 : index
    %40 = vector.load %arg13[%c24_45, %c0_46] : memref<72x512xbf16, #tpu.memory_space<vmem>>, vector<8x512xbf16>
    tpu.vector_store %arg13[%c24_45, %c0_46], %39 {strides = array<i32>} : memref<72x512xbf16, #tpu.memory_space<vmem>>, vector<8x512xbf16>,
    %c0_47 = arith.constant 0 : index
    %c265_48 = arith.constant 265 : index
    %41 = vector.load %arg12[%c0_47, %c265_48] : memref<8x1024xbf16, #tpu.memory_space<vmem>>, vector<8x512xbf16>
    %c32_49 = arith.constant 32 : index
    %c0_50 = arith.constant 0 : index
    %42 = vector.load %arg13[%c32_49, %c0_50] : memref<72x512xbf16, #tpu.memory_space<vmem>>, vector<8x512xbf16>
    tpu.vector_store %arg13[%c32_49, %c0_50], %41 {strides = array<i32>} : memref<72x512xbf16, #tpu.memory_space<vmem>>, vector<8x512xbf16>,
    %c0_51 = arith.constant 0 : index
    %c268 = arith.constant 268 : index
    %43 = vector.load %arg12[%c0_51, %c268] : memref<8x1024xbf16, #tpu.memory_space<vmem>>, vector<8x512xbf16>
    %c40_52 = arith.constant 40 : index
    %c0_53 = arith.constant 0 : index
    %44 = vector.load %arg13[%c40_52, %c0_53] : memref<72x512xbf16, #tpu.memory_space<vmem>>, vector<8x512xbf16>
    tpu.vector_store %arg13[%c40_52, %c0_53], %43 {strides = array<i32>} : memref<72x512xbf16, #tpu.memory_space<vmem>>, vector<8x512xbf16>,
    %c0_54 = arith.constant 0 : index
    %c340 = arith.constant 340 : index
    %45 = vector.load %arg12[%c0_54, %c340] : memref<8x1024xbf16, #tpu.memory_space<vmem>>, vector<8x512xbf16>
    %c48_55 = arith.constant 48 : index
    %c0_56 = arith.constant 0 : index
    %46 = vector.load %arg13[%c48_55, %c0_56] : memref<72x512xbf16, #tpu.memory_space<vmem>>, vector<8x512xbf16>
    tpu.vector_store %arg13[%c48_55, %c0_56], %45 {strides = array<i32>} : memref<72x512xbf16, #tpu.memory_space<vmem>>, vector<8x512xbf16>,
    %c0_57 = arith.constant 0 : index
    %c343 = arith.constant 343 : index
    %47 = vector.load %arg12[%c0_57, %c343] : memref<8x1024xbf16, #tpu.memory_space<vmem>>, vector<8x512xbf16>
    %c56_58 = arith.constant 56 : index
    %c0_59 = arith.constant 0 : index
    %48 = vector.load %arg13[%c56_58, %c0_59] : memref<72x512xbf16, #tpu.memory_space<vmem>>, vector<8x512xbf16>
    tpu.vector_store %arg13[%c56_58, %c0_59], %47 {strides = array<i32>} : memref<72x512xbf16, #tpu.memory_space<vmem>>, vector<8x512xbf16>,
    %c0_60 = arith.constant 0 : index
    %c346 = arith.constant 346 : index
    %49 = vector.load %arg12[%c0_60, %c346] : memref<8x1024xbf16, #tpu.memory_space<vmem>>, vector<8x512xbf16>
    %c64_61 = arith.constant 64 : index
    %c0_62 = arith.constant 0 : index
    %50 = vector.load %arg13[%c64_61, %c0_62] : memref<72x512xbf16, #tpu.memory_space<vmem>>, vector<8x512xbf16>
    tpu.vector_store %arg13[%c64_61, %c0_62], %49 {strides = array<i32>} : memref<72x512xbf16, #tpu.memory_space<vmem>>, vector<8x512xbf16>,
    %c0_63 = arith.constant 0 : index
    %c0_64 = arith.constant 0 : index
    %51 = vector.load %arg4[%c0_63, %c0_64] : memref<8x72xbf16, #tpu.memory_space<vmem>>, vector<8x72xbf16>
    %c0_65 = arith.constant 0 : index
    %c0_66 = arith.constant 0 : index
    %52 = vector.load %arg13[%c0_65, %c0_66] : memref<72x512xbf16, #tpu.memory_space<vmem>>, vector<72x512xbf16>
    %cst_67 = arith.constant dense<0.000000e+00> : vector<8x512xf32>
    %53 = tpu.matmul %51, %52, %cst_67 {dimension_numbers = #tpu.dot_dimension_numbers<[1], [0], [0], [1], [0, 0, 1, 1], [], []>} : vector<8x72xbf16>, vector<72x512xbf16>, vector<8x512xf32> -> vector<8x512xf32>
    %c0_68 = arith.constant 0 : index
    %c0_69 = arith.constant 0 : index
    %54 = vector.load %arg8[%c0_68, %c0_69] : memref<8x1xf32, #tpu.memory_space<vmem>>, vector<8x1xf32>
    %55 = vector.broadcast %54 : vector<8x1xf32> to vector<8x512xf32>
    %56 = arith.addf %53, %55 : vector<8x512xf32>
    %57 = arith.truncf %56 : vector<8x512xf32> to vector<8x512xbf16>
    %c0_70 = arith.constant 0 : index
    %c0_71 = arith.constant 0 : index
    %58 = vector.load %arg14[%c0_70, %c0_71] : memref<8x1536xbf16, #tpu.memory_space<vmem>>, vector<8x512xbf16>
    tpu.vector_store %arg14[%c0_70, %c0_71], %57 {strides = array<i32>} : memref<8x1536xbf16, #tpu.memory_space<vmem>>, vector<8x512xbf16>,
    %cst_72 = arith.constant 0.000000e+00 : f32
    %59 = vector.broadcast %cst_72 : f32 to vector<8x512xf32>
    %60 = arith.maximumf %32, %59 : vector<8x512xf32>
    %61 = arith.addf %1, %60 : vector<8x512xf32>
    %62 = vector.broadcast %2 : vector<1x512xf32> to vector<8x512xf32>
    %63 = arith.mulf %32, %62 : vector<8x512xf32>
    %64 = arith.truncf %63 : vector<8x512xf32> to vector<8x512xbf16>
    %c0_73 = arith.constant 0 : index
    %c265_74 = arith.constant 265 : index
    %65 = vector.load %arg12[%c0_73, %c265_74] : memref<8x1024xbf16, #tpu.memory_space<vmem>>, vector<8x512xbf16>
    tpu.vector_store %arg12[%c0_73, %c265_74], %64 {strides = array<i32>} : memref<8x1024xbf16, #tpu.memory_space<vmem>>, vector<8x512xbf16>,
    %c0_75 = arith.constant 0 : index
    %c184_76 = arith.constant 184 : index
    %66 = vector.load %arg12[%c0_75, %c184_76] : memref<8x1024xbf16, #tpu.memory_space<vmem>>, vector<8x512xbf16>
    %c0_77 = arith.constant 0 : index
    %c0_78 = arith.constant 0 : index
    %67 = vector.load %arg13[%c0_77, %c0_78] : memref<72x512xbf16, #tpu.memory_space<vmem>>, vector<8x512xbf16>
    tpu.vector_store %arg13[%c0_77, %c0_78], %66 {strides = array<i32>} : memref<72x512xbf16, #tpu.memory_space<vmem>>, vector<8x512xbf16>,
    %c0_79 = arith.constant 0 : index
    %c187_80 = arith.constant 187 : index
    %68 = vector.load %arg12[%c0_79, %c187_80] : memref<8x1024xbf16, #tpu.memory_space<vmem>>, vector<8x512xbf16>
    %c8_81 = arith.constant 8 : index
    %c0_82 = arith.constant 0 : index
    %69 = vector.load %arg13[%c8_81, %c0_82] : memref<72x512xbf16, #tpu.memory_space<vmem>>, vector<8x512xbf16>
    tpu.vector_store %arg13[%c8_81, %c0_82], %68 {strides = array<i32>} : memref<72x512xbf16, #tpu.memory_space<vmem>>, vector<8x512xbf16>,
    %c0_83 = arith.constant 0 : index
    %c190_84 = arith.constant 190 : index
    %70 = vector.load %arg12[%c0_83, %c190_84] : memref<8x1024xbf16, #tpu.memory_space<vmem>>, vector<8x512xbf16>
    %c16_85 = arith.constant 16 : index
    %c0_86 = arith.constant 0 : index
    %71 = vector.load %arg13[%c16_85, %c0_86] : memref<72x512xbf16, #tpu.memory_space<vmem>>, vector<8x512xbf16>
    tpu.vector_store %arg13[%c16_85, %c0_86], %70 {strides = array<i32>} : memref<72x512xbf16, #tpu.memory_space<vmem>>, vector<8x512xbf16>,
    %c0_87 = arith.constant 0 : index
    %c262_88 = arith.constant 262 : index
    %72 = vector.load %arg12[%c0_87, %c262_88] : memref<8x1024xbf16, #tpu.memory_space<vmem>>, vector<8x512xbf16>
    %c24_89 = arith.constant 24 : index
    %c0_90 = arith.constant 0 : index
    %73 = vector.load %arg13[%c24_89, %c0_90] : memref<72x512xbf16, #tpu.memory_space<vmem>>, vector<8x512xbf16>
    tpu.vector_store %arg13[%c24_89, %c0_90], %72 {strides = array<i32>} : memref<72x512xbf16, #tpu.memory_space<vmem>>, vector<8x512xbf16>,
    %c0_91 = arith.constant 0 : index
    %c265_92 = arith.constant 265 : index
    %74 = vector.load %arg12[%c0_91, %c265_92] : memref<8x1024xbf16, #tpu.memory_space<vmem>>, vector<8x512xbf16>
    %c32_93 = arith.constant 32 : index
    %c0_94 = arith.constant 0 : index
    %75 = vector.load %arg13[%c32_93, %c0_94] : memref<72x512xbf16, #tpu.memory_space<vmem>>, vector<8x512xbf16>
    tpu.vector_store %arg13[%c32_93, %c0_94], %74 {strides = array<i32>} : memref<72x512xbf16, #tpu.memory_space<vmem>>, vector<8x512xbf16>,
    %c0_95 = arith.constant 0 : index
    %c268_96 = arith.constant 268 : index
    %76 = vector.load %arg12[%c0_95, %c268_96] : memref<8x1024xbf16, #tpu.memory_space<vmem>>, vector<8x512xbf16>
    %c40_97 = arith.constant 40 : index
    %c0_98 = arith.constant 0 : index
    %77 = vector.load %arg13[%c40_97, %c0_98] : memref<72x512xbf16, #tpu.memory_space<vmem>>, vector<8x512xbf16>
    tpu.vector_store %arg13[%c40_97, %c0_98], %76 {strides = array<i32>} : memref<72x512xbf16, #tpu.memory_space<vmem>>, vector<8x512xbf16>,
    %c0_99 = arith.constant 0 : index
    %c340_100 = arith.constant 340 : index
    %78 = vector.load %arg12[%c0_99, %c340_100] : memref<8x1024xbf16, #tpu.memory_space<vmem>>, vector<8x512xbf16>
    %c48_101 = arith.constant 48 : index
    %c0_102 = arith.constant 0 : index
    %79 = vector.load %arg13[%c48_101, %c0_102] : memref<72x512xbf16, #tpu.memory_space<vmem>>, vector<8x512xbf16>
    tpu.vector_store %arg13[%c48_101, %c0_102], %78 {strides = array<i32>} : memref<72x512xbf16, #tpu.memory_space<vmem>>, vector<8x512xbf16>,
    %c0_103 = arith.constant 0 : index
    %c343_104 = arith.constant 343 : index
    %80 = vector.load %arg12[%c0_103, %c343_104] : memref<8x1024xbf16, #tpu.memory_space<vmem>>, vector<8x512xbf16>
    %c56_105 = arith.constant 56 : index
    %c0_106 = arith.constant 0 : index
    %81 = vector.load %arg13[%c56_105, %c0_106] : memref<72x512xbf16, #tpu.memory_space<vmem>>, vector<8x512xbf16>
    tpu.vector_store %arg13[%c56_105, %c0_106], %80 {strides = array<i32>} : memref<72x512xbf16, #tpu.memory_space<vmem>>, vector<8x512xbf16>,
    %c0_107 = arith.constant 0 : index
    %c346_108 = arith.constant 346 : index
    %82 = vector.load %arg12[%c0_107, %c346_108] : memref<8x1024xbf16, #tpu.memory_space<vmem>>, vector<8x512xbf16>
    %c64_109 = arith.constant 64 : index
    %c0_110 = arith.constant 0 : index
    %83 = vector.load %arg13[%c64_109, %c0_110] : memref<72x512xbf16, #tpu.memory_space<vmem>>, vector<8x512xbf16>
    tpu.vector_store %arg13[%c64_109, %c0_110], %82 {strides = array<i32>} : memref<72x512xbf16, #tpu.memory_space<vmem>>, vector<8x512xbf16>,
    %c0_111 = arith.constant 0 : index
    %c0_112 = arith.constant 0 : index
    %84 = vector.load %arg4[%c0_111, %c0_112] : memref<8x72xbf16, #tpu.memory_space<vmem>>, vector<8x72xbf16>
    %c0_113 = arith.constant 0 : index
    %c0_114 = arith.constant 0 : index
    %85 = vector.load %arg13[%c0_113, %c0_114] : memref<72x512xbf16, #tpu.memory_space<vmem>>, vector<72x512xbf16>
    %cst_115 = arith.constant dense<0.000000e+00> : vector<8x512xf32>
    %86 = tpu.matmul %84, %85, %cst_115 {dimension_numbers = #tpu.dot_dimension_numbers<[1], [0], [0], [1], [0, 0, 1, 1], [], []>} : vector<8x72xbf16>, vector<72x512xbf16>, vector<8x512xf32> -> vector<8x512xf32>
    %c0_116 = arith.constant 0 : index
    %c0_117 = arith.constant 0 : index
    %87 = vector.load %arg8[%c0_116, %c0_117] : memref<8x1xf32, #tpu.memory_space<vmem>>, vector<8x1xf32>
    %88 = vector.broadcast %87 : vector<8x1xf32> to vector<8x512xf32>
    %89 = arith.addf %86, %88 : vector<8x512xf32>
    %90 = arith.truncf %89 : vector<8x512xf32> to vector<8x512xbf16>
    %c0_118 = arith.constant 0 : index
    %c512 = arith.constant 512 : index
    %91 = vector.load %arg14[%c0_118, %c512] : memref<8x1536xbf16, #tpu.memory_space<vmem>>, vector<8x512xbf16>
    tpu.vector_store %arg14[%c0_118, %c512], %90 {strides = array<i32>} : memref<8x1536xbf16, #tpu.memory_space<vmem>>, vector<8x512xbf16>,
    %92 = vector.broadcast %2 : vector<1x512xf32> to vector<8x512xf32>
    %93 = arith.mulf %89, %92 : vector<8x512xf32>
    %94 = arith.truncf %93 : vector<8x512xf32> to vector<8x512xbf16>
    %c0_119 = arith.constant 0 : index
    %c265_120 = arith.constant 265 : index
    %95 = vector.load %arg12[%c0_119, %c265_120] : memref<8x1024xbf16, #tpu.memory_space<vmem>>, vector<8x512xbf16>
    tpu.vector_store %arg12[%c0_119, %c265_120], %94 {strides = array<i32>} : memref<8x1024xbf16, #tpu.memory_space<vmem>>, vector<8x512xbf16>,
    %c0_121 = arith.constant 0 : index
    %c130_122 = arith.constant 130 : index
    %96 = vector.load %arg12[%c0_121, %c130_122] : memref<8x1024xbf16, #tpu.memory_space<vmem>>, vector<8x512xbf16>
    %c0_123 = arith.constant 0 : index
    %c0_124 = arith.constant 0 : index
    %97 = vector.load %arg13[%c0_123, %c0_124] : memref<72x512xbf16, #tpu.memory_space<vmem>>, vector<8x512xbf16>
    tpu.vector_store %arg13[%c0_123, %c0_124], %96 {strides = array<i32>} : memref<72x512xbf16, #tpu.memory_space<vmem>>, vector<8x512xbf16>,
    %c0_125 = arith.constant 0 : index
    %c135 = arith.constant 135 : index
    %98 = vector.load %arg12[%c0_125, %c135] : memref<8x1024xbf16, #tpu.memory_space<vmem>>, vector<8x512xbf16>
    %c8_126 = arith.constant 8 : index
    %c0_127 = arith.constant 0 : index
    %99 = vector.load %arg13[%c8_126, %c0_127] : memref<72x512xbf16, #tpu.memory_space<vmem>>, vector<8x512xbf16>
    tpu.vector_store %arg13[%c8_126, %c0_127], %98 {strides = array<i32>} : memref<72x512xbf16, #tpu.memory_space<vmem>>, vector<8x512xbf16>,
    %c0_128 = arith.constant 0 : index
    %c140 = arith.constant 140 : index
    %100 = vector.load %arg12[%c0_128, %c140] : memref<8x1024xbf16, #tpu.memory_space<vmem>>, vector<8x512xbf16>
    %c16_129 = arith.constant 16 : index
    %c0_130 = arith.constant 0 : index
    %101 = vector.load %arg13[%c16_129, %c0_130] : memref<72x512xbf16, #tpu.memory_space<vmem>>, vector<8x512xbf16>
    tpu.vector_store %arg13[%c16_129, %c0_130], %100 {strides = array<i32>} : memref<72x512xbf16, #tpu.memory_space<vmem>>, vector<8x512xbf16>,
    %c0_131 = arith.constant 0 : index
    %c260 = arith.constant 260 : index
    %102 = vector.load %arg12[%c0_131, %c260] : memref<8x1024xbf16, #tpu.memory_space<vmem>>, vector<8x512xbf16>
    %c24_132 = arith.constant 24 : index
    %c0_133 = arith.constant 0 : index
    %103 = vector.load %arg13[%c24_132, %c0_133] : memref<72x512xbf16, #tpu.memory_space<vmem>>, vector<8x512xbf16>
    tpu.vector_store %arg13[%c24_132, %c0_133], %102 {strides = array<i32>} : memref<72x512xbf16, #tpu.memory_space<vmem>>, vector<8x512xbf16>,
    %c0_134 = arith.constant 0 : index
    %c265_135 = arith.constant 265 : index
    %104 = vector.load %arg12[%c0_134, %c265_135] : memref<8x1024xbf16, #tpu.memory_space<vmem>>, vector<8x512xbf16>
    %c32_136 = arith.constant 32 : index
    %c0_137 = arith.constant 0 : index
    %105 = vector.load %arg13[%c32_136, %c0_137] : memref<72x512xbf16, #tpu.memory_space<vmem>>, vector<8x512xbf16>
    tpu.vector_store %arg13[%c32_136, %c0_137], %104 {strides = array<i32>} : memref<72x512xbf16, #tpu.memory_space<vmem>>, vector<8x512xbf16>,
    %c0_138 = arith.constant 0 : index
    %c270 = arith.constant 270 : index
    %106 = vector.load %arg12[%c0_138, %c270] : memref<8x1024xbf16, #tpu.memory_space<vmem>>, vector<8x512xbf16>
    %c40_139 = arith.constant 40 : index
    %c0_140 = arith.constant 0 : index
    %107 = vector.load %arg13[%c40_139, %c0_140] : memref<72x512xbf16, #tpu.memory_space<vmem>>, vector<8x512xbf16>
    tpu.vector_store %arg13[%c40_139, %c0_140], %106 {strides = array<i32>} : memref<72x512xbf16, #tpu.memory_space<vmem>>, vector<8x512xbf16>,
    %c0_141 = arith.constant 0 : index
    %c390 = arith.constant 390 : index
    %108 = vector.load %arg12[%c0_141, %c390] : memref<8x1024xbf16, #tpu.memory_space<vmem>>, vector<8x512xbf16>
    %c48_142 = arith.constant 48 : index
    %c0_143 = arith.constant 0 : index
    %109 = vector.load %arg13[%c48_142, %c0_143] : memref<72x512xbf16, #tpu.memory_space<vmem>>, vector<8x512xbf16>
    tpu.vector_store %arg13[%c48_142, %c0_143], %108 {strides = array<i32>} : memref<72x512xbf16, #tpu.memory_space<vmem>>, vector<8x512xbf16>,
    %c0_144 = arith.constant 0 : index
    %c395 = arith.constant 395 : index
    %110 = vector.load %arg12[%c0_144, %c395] : memref<8x1024xbf16, #tpu.memory_space<vmem>>, vector<8x512xbf16>
    %c56_145 = arith.constant 56 : index
    %c0_146 = arith.constant 0 : index
    %111 = vector.load %arg13[%c56_145, %c0_146] : memref<72x512xbf16, #tpu.memory_space<vmem>>, vector<8x512xbf16>
    tpu.vector_store %arg13[%c56_145, %c0_146], %110 {strides = array<i32>} : memref<72x512xbf16, #tpu.memory_space<vmem>>, vector<8x512xbf16>,
    %c0_147 = arith.constant 0 : index
    %c400 = arith.constant 400 : index
    %112 = vector.load %arg12[%c0_147, %c400] : memref<8x1024xbf16, #tpu.memory_space<vmem>>, vector<8x512xbf16>
    %c64_148 = arith.constant 64 : index
    %c0_149 = arith.constant 0 : index
    %113 = vector.load %arg13[%c64_148, %c0_149] : memref<72x512xbf16, #tpu.memory_space<vmem>>, vector<8x512xbf16>
    tpu.vector_store %arg13[%c64_148, %c0_149], %112 {strides = array<i32>} : memref<72x512xbf16, #tpu.memory_space<vmem>>, vector<8x512xbf16>,
    %c0_150 = arith.constant 0 : index
    %c0_151 = arith.constant 0 : index
    %114 = vector.load %arg5[%c0_150, %c0_151] : memref<8x72xbf16, #tpu.memory_space<vmem>>, vector<8x72xbf16>
    %c0_152 = arith.constant 0 : index
    %c0_153 = arith.constant 0 : index
    %115 = vector.load %arg13[%c0_152, %c0_153] : memref<72x512xbf16, #tpu.memory_space<vmem>>, vector<72x512xbf16>
    %cst_154 = arith.constant dense<0.000000e+00> : vector<8x512xf32>
    %116 = tpu.matmul %114, %115, %cst_154 {dimension_numbers = #tpu.dot_dimension_numbers<[1], [0], [0], [1], [0, 0, 1, 1], [], []>} : vector<8x72xbf16>, vector<72x512xbf16>, vector<8x512xf32> -> vector<8x512xf32>
    %c0_155 = arith.constant 0 : index
    %c0_156 = arith.constant 0 : index
    %117 = vector.load %arg9[%c0_155, %c0_156] : memref<8x1xf32, #tpu.memory_space<vmem>>, vector<8x1xf32>
    %118 = vector.broadcast %117 : vector<8x1xf32> to vector<8x512xf32>
    %119 = arith.addf %116, %118 : vector<8x512xf32>
    %120 = arith.truncf %119 : vector<8x512xf32> to vector<8x512xbf16>
    %c0_157 = arith.constant 0 : index
    %c1024 = arith.constant 1024 : index
    %121 = vector.load %arg14[%c0_157, %c1024] : memref<8x1536xbf16, #tpu.memory_space<vmem>>, vector<8x512xbf16>
    tpu.vector_store %arg14[%c0_157, %c1024], %120 {strides = array<i32>} : memref<8x1536xbf16, #tpu.memory_space<vmem>>, vector<8x512xbf16>,
    %c0_158 = arith.constant 0 : index
    %c0_159 = arith.constant 0 : index
    %122 = vector.load %arg6[%c0_158, %c0_159] : memref<8x8xbf16, #tpu.memory_space<vmem>>, vector<8x8xbf16>
    %c0_160 = arith.constant 0 : index
    %c0_161 = arith.constant 0 : index
    %123 = vector.load %arg14[%c0_160, %c0_161] : memref<8x1536xbf16, #tpu.memory_space<vmem>>, vector<8x1536xbf16>
    %cst_162 = arith.constant dense<0.000000e+00> : vector<8x1536xf32>
    %124 = tpu.matmul %122, %123, %cst_162 {dimension_numbers = #tpu.dot_dimension_numbers<[1], [0], [0], [1], [0, 0, 1, 1], [], []>} : vector<8x8xbf16>, vector<8x1536xbf16>, vector<8x1536xf32> -> vector<8x1536xf32>
    %c0_163 = arith.constant 0 : index
    %c0_164 = arith.constant 0 : index
    %125 = vector.load %arg10[%c0_163, %c0_164] : memref<8x1xf32, #tpu.memory_space<vmem>>, vector<8x1xf32>
    %126 = vector.broadcast %125 : vector<8x1xf32> to vector<8x1536xf32>
    %127 = arith.addf %124, %126 : vector<8x1536xf32>
    %cst_165 = arith.constant 0.000000e+00 : f32
    %128 = vector.broadcast %cst_165 : f32 to vector<8x1536xf32>
    %129 = arith.maximumf %127, %128 : vector<8x1536xf32>
    %130 = vector.extract_strided_slice %129 {offsets = [0, 0], sizes = [8, 512], strides = [1, 1]} : vector<8x1536xf32> to vector<8x512xf32>
    %131 = arith.addf %61, %130 : vector<8x512xf32>
    %132 = vector.extract_strided_slice %129 {offsets = [0, 512], sizes = [8, 512], strides = [1, 1]} : vector<8x1536xf32> to vector<8x512xf32>
    %133 = arith.addf %131, %132 : vector<8x512xf32>
    %134 = vector.extract_strided_slice %129 {offsets = [0, 1024], sizes = [8, 512], strides = [1, 1]} : vector<8x1536xf32> to vector<8x512xf32>
    %135 = arith.addf %133, %134 : vector<8x512xf32>
    %c0_166 = arith.constant 0 : index
    %c0_167 = arith.constant 0 : index
    %c0_168 = arith.constant 0 : index
    %136 = vector.load %arg11[%c0_166, %c0_167, %c0_168] : memref<1x8x512xf32, #tpu.memory_space<vmem>>, vector<1x8x512xf32>
    %137 = vector.shape_cast %136 : vector<1x8x512xf32> to vector<8x512xf32>
    %138 = vector.shape_cast %135 : vector<8x512xf32> to vector<1x8x512xf32>
    tpu.vector_store %arg11[%c0_166, %c0_167, %c0_168], %138 {strides = array<i32>} : memref<1x8x512xf32, #tpu.memory_space<vmem>>, vector<1x8x512xf32>,
    return
  }
  func.func @transform_0(%arg0: i32) -> (i32, i32, i32) {
    %c0_i32 = arith.constant 0 : i32
    %c0_i32_0 = arith.constant 0 : i32
    %c0_i32_1 = arith.constant 0 : i32
    return %arg0, %c0_i32, %c0_i32_0 : i32, i32, i32
  }
  func.func @transform_1(%arg0: i32) -> (i32, i32) {
    %c0_i32 = arith.constant 0 : i32
    %c0_i32_0 = arith.constant 0 : i32
    %c0_i32_1 = arith.constant 0 : i32
    return %c0_i32, %c0_i32_0 : i32, i32
  }
  func.func @transform_2(%arg0: i32) -> (i32, i32) {
    %c0_i32 = arith.constant 0 : i32
    %c0_i32_0 = arith.constant 0 : i32
    %c0_i32_1 = arith.constant 0 : i32
    return %c0_i32, %c0_i32_0 : i32, i32
  }
  func.func @transform_3(%arg0: i32) -> (i32, i32) {
    %c0_i32 = arith.constant 0 : i32
    %c0_i32_0 = arith.constant 0 : i32
    %c0_i32_1 = arith.constant 0 : i32
    return %c0_i32, %c0_i32_0 : i32, i32
  }
  func.func @transform_4(%arg0: i32) -> (i32, i32) {
    %c0_i32 = arith.constant 0 : i32
    %c0_i32_0 = arith.constant 0 : i32
    %c0_i32_1 = arith.constant 0 : i32
    return %c0_i32, %c0_i32_0 : i32, i32
  }
  func.func @transform_5(%arg0: i32) -> (i32, i32) {
    %c0_i32 = arith.constant 0 : i32
    %c0_i32_0 = arith.constant 0 : i32
    %c0_i32_1 = arith.constant 0 : i32
    return %c0_i32, %c0_i32_0 : i32, i32
  }
  func.func @transform_6(%arg0: i32) -> (i32, i32) {
    %c0_i32 = arith.constant 0 : i32
    %c0_i32_0 = arith.constant 0 : i32
    %c0_i32_1 = arith.constant 0 : i32
    return %c0_i32, %c0_i32_0 : i32, i32
  }
  func.func @transform_7(%arg0: i32) -> (i32, i32) {
    %c0_i32 = arith.constant 0 : i32
    %c0_i32_0 = arith.constant 0 : i32
    %c0_i32_1 = arith.constant 0 : i32
    return %c0_i32, %c0_i32_0 : i32, i32
  }
  func.func @transform_8(%arg0: i32) -> (i32, i32) {
    %c0_i32 = arith.constant 0 : i32
    %c0_i32_0 = arith.constant 0 : i32
    %c0_i32_1 = arith.constant 0 : i32
    return %c0_i32, %c0_i32_0 : i32, i32
  }
  func.func @transform_9(%arg0: i32) -> (i32, i32) {
    %c0_i32 = arith.constant 0 : i32
    %c0_i32_0 = arith.constant 0 : i32
    %c0_i32_1 = arith.constant 0 : i32
    return %c0_i32, %c0_i32_0 : i32, i32
  }
  func.func @transform_10(%arg0: i32) -> (i32, i32, i32) {
    %c0_i32 = arith.constant 0 : i32
    %c0_i32_0 = arith.constant 0 : i32
    %c0_i32_1 = arith.constant 0 : i32
    return %arg0, %c0_i32, %c0_i32_0 : i32, i32, i32
  }
}

</mosaic_0001>

<llo_original>
// kernel: dac_block.1
$region0: #{dac_block.1}
  #allocation0 [shape = 'u32[]', space=smem, size = 0x4, offset = 0x4, fixed_abs, tag = 'smem constant byte address 0x4 - core index']
  #allocation1 [shape = 'u32[144,128]{1,0:T(1,128)}', space=vmem, size = 0x12000, scoped, tag = 'internal scratch']
  #allocation2 [shape = 'bf16[8,1024]{1,0:T(8,128)(2,1)}', space=vmem, size = 0x4000, scoped, tag = 'scratch operand']
  #allocation3 [shape = 'bf16[72,512]{1,0:T(8,128)(2,1)}', space=vmem, size = 0x12000, scoped, tag = 'scratch operand']
  #allocation4 [shape = 'bf16[8,1536]{1,0:T(8,128)(2,1)}', space=vmem, size = 0x6000, scoped, tag = 'scratch operand']
  %s0 = inlined_call_operand.vmem [shape: f32[2,8,512], index: 0, kind: input, shape index: {}]
  %s1 = inlined_call_operand.vmem [shape: f32[1,512], index: 1, kind: input, shape index: {}]
  %s2 = inlined_call_operand.vmem [shape: bf16[8,72], index: 2, kind: input, shape index: {}]
  %s3 = inlined_call_operand.vmem [shape: bf16[8,72], index: 3, kind: input, shape index: {}]
  %s4 = inlined_call_operand.vmem [shape: bf16[8,72], index: 4, kind: input, shape index: {}]
  %s5 = inlined_call_operand.vmem [shape: bf16[8,8], index: 5, kind: input, shape index: {}]
  %s6 = inlined_call_operand.vmem [shape: f32[8,1], index: 6, kind: input, shape index: {}]
  %s7 = inlined_call_operand.vmem [shape: f32[8,1], index: 7, kind: input, shape index: {}]
  %s8 = inlined_call_operand.vmem [shape: f32[8,1], index: 8, kind: input, shape index: {}]
  %s9 = inlined_call_operand.vmem [shape: f32[8,1], index: 9, kind: input, shape index: {}]
  %s10 = inlined_call_operand.vmem [shape: f32[2,8,512], index: 10, kind: output, shape index: {}]
  %s11 = sld [smem:[#allocation0]]
  $region73: #{dac_block.1} parent=0
    _
  %s13 = ssub.s32 1, %s11
  %s14 = scalar_select 0, %s13, %s11
  loop: start=0, step=1, limit=4
  $region2: #{dac_block.1} parent=0 // loop_pre_header
    _
  $region3: #{dac_block.1} parent=0 // loop_header
    %s16 = sphi 0, %s20
    %p17 = scmp.ge.s32.totalorder %s16, 4
    %s26 = sphi 0, %s28
    %s29 = sphi 0, %s26
    %s30 = sphi 0, %s29
    %s46 = sphi 0, %s30
    %s50 = sphi 0, %s50
    %s52 = sphi 0, %s50
    %s53 = sphi 0, %s52
    %s67 = sphi 0, %s53
    %s71 = sphi 0, %s71
    %s73 = sphi 0, %s71
    %s74 = sphi 0, %s73
    %s88 = sphi 0, %s74
    %s92 = sphi 0, %s92
    %s94 = sphi 0, %s92
    %s95 = sphi 0, %s94
    %s109 = sphi 0, %s95
    %s113 = sphi 0, %s113
    %s115 = sphi 0, %s113
    %s116 = sphi 0, %s115
    %s130 = sphi 0, %s116
    %s134 = sphi 0, %s134
    %s136 = sphi 0, %s134
    %s137 = sphi 0, %s136
    %s151 = sphi 0, %s137
    %s155 = sphi 0, %s155
    %s157 = sphi 0, %s155
    %s158 = sphi 0, %s157
    %s172 = sphi 0, %s158
    %s176 = sphi 0, %s176
    %s178 = sphi 0, %s176
    %s179 = sphi 0, %s178
    %s193 = sphi 0, %s179
    %s197 = sphi 0, %s197
    %s199 = sphi 0, %s197
    %s200 = sphi 0, %s199
    %s214 = sphi 0, %s200
    %s218 = sphi 0, %s218
    %s220 = sphi 0, %s218
    %s221 = sphi 0, %s220
    %s235 = sphi 0, %s221
    %s241 = sphi 0, %s243
    %s244 = sphi 0, %s241
    %s245 = sphi 0, %s244
    %s261 = sphi 0, %s245
  $region4: #{dac_block.1} parent=0 // loop_header_branch
    %19 = sbr.rel (%p17) target = $region8
  $region5: #{dac_block.1} parent=0 // loop_body
    %s21 = ssub.s32 %s16, 1
    %s22 = ssub.s32 %s16, 2
    %s23 = sadd.s32 %s16, 1
    %s24 = ssub.s32 %s16, %s23
    %p25 = scmp.eq.s32.totalorder %s24, 0
    %s27 = sadd.s32 %s26, 1
    %s28 = scalar_select %p25, %s26, %s27
    %p31 = pneg %p25
    %p32 = scmp.eq.s32.totalorder %s16, 1
    %p33 = por %p31, %p32
    %p34 = scmp.ne.s32.totalorder %s26, %s29
    %p35 = scmp.eq.s32.totalorder %s16, 0
    %p36 = por %p34, %p35
    %p37 = scmp.ne.s32.totalorder %s26, %s29
    %p38 = scmp.eq.s32.totalorder %s21, 1
    %p39 = por %p37, %p38
    %p40 = scmp.ne.s32.totalorder %s29, %s30
    %p41 = scmp.eq.s32.totalorder %s21, 0
    %p42 = por %p40, %p41
    %p43 = scmp.ne.s32.totalorder %s29, %s30
    %p44 = scmp.eq.s32.totalorder %s22, 1
    %p45 = por %p43, %p44
    %p47 = scmp.ne.s32.totalorder %s30, %s46
    %p48 = scmp.eq.s32.totalorder %s22, 0
    %p49 = por %p47, %p48
    %s51 = sadd.s32 %s50, 1
    %p54 = scmp.eq.s32.totalorder %s16, 1
    %p55 = scmp.ne.s32.totalorder %s50, %s52
    %p56 = scmp.eq.s32.totalorder %s16, 0
    %p57 = por %p55, %p56
    %p58 = scmp.ne.s32.totalorder %s50, %s52
    %p59 = scmp.eq.s32.totalorder %s21, 1
    %p60 = por %p58, %p59
    %p61 = scmp.ne.s32.totalorder %s52, %s53
    %p62 = scmp.eq.s32.totalorder %s21, 0
    %p63 = por %p61, %p62
    %p64 = scmp.ne.s32.totalorder %s52, %s53
    %p65 = scmp.eq.s32.totalorder %s22, 1
    %p66 = por %p64, %p65
    %p68 = scmp.ne.s32.totalorder %s53, %s67
    %p69 = scmp.eq.s32.totalorder %s22, 0
    %p70 = por %p68, %p69
    %s72 = sadd.s32 %s71, 1
    %p75 = scmp.eq.s32.totalorder %s16, 1
    %p76 = scmp.ne.s32.totalorder %s71, %s73
    %p77 = scmp.eq.s32.totalorder %s16, 0
    %p78 = por %p76, %p77
    %p79 = scmp.ne.s32.totalorder %s71, %s73
    %p80 = scmp.eq.s32.totalorder %s21, 1
    %p81 = por %p79, %p80
    %p82 = scmp.ne.s32.totalorder %s73, %s74
    %p83 = scmp.eq.s32.totalorder %s21, 0
    %p84 = por %p82, %p83
    %p85 = scmp.ne.s32.totalorder %s73, %s74
    %p86 = scmp.eq.s32.totalorder %s22, 1
    %p87 = por %p85, %p86
    %p89 = scmp.ne.s32.totalorder %s74, %s88
    %p90 = scmp.eq.s32.totalorder %s22, 0
    %p91 = por %p89, %p90
    %s93 = sadd.s32 %s92, 1
    %p96 = scmp.eq.s32.totalorder %s16, 1
    %p97 = scmp.ne.s32.totalorder %s92, %s94
    %p98 = scmp.eq.s32.totalorder %s16, 0
    %p99 = por %p97, %p98
    %p100 = scmp.ne.s32.totalorder %s92, %s94
    %p101 = scmp.eq.s32.totalorder %s21, 1
    %p102 = por %p100, %p101
    %p103 = scmp.ne.s32.totalorder %s94, %s95
    %p104 = scmp.eq.s32.totalorder %s21, 0
    %p105 = por %p103, %p104
    %p106 = scmp.ne.s32.totalorder %s94, %s95
    %p107 = scmp.eq.s32.totalorder %s22, 1
    %p108 = por %p106, %p107
    %p110 = scmp.ne.s32.totalorder %s95, %s109
    %p111 = scmp.eq.s32.totalorder %s22, 0
    %p112 = por %p110, %p111
    %s114 = sadd.s32 %s113, 1
    %p117 = scmp.eq.s32.totalorder %s16, 1
    %p118 = scmp.ne.s32.totalorder %s113, %s115
    %p119 = scmp.eq.s32.totalorder %s16, 0
    %p120 = por %p118, %p119
    %p121 = scmp.ne.s32.totalorder %s113, %s115
    %p122 = scmp.eq.s32.totalorder %s21, 1
    %p123 = por %p121, %p122
    %p124 = scmp.ne.s32.totalorder %s115, %s116
    %p125 = scmp.eq.s32.totalorder %s21, 0
    %p126 = por %p124, %p125
    %p127 = scmp.ne.s32.totalorder %s115, %s116
    %p128 = scmp.eq.s32.totalorder %s22, 1
    %p129 = por %p127, %p128
    %p131 = scmp.ne.s32.totalorder %s116, %s130
    %p132 = scmp.eq.s32.totalorder %s22, 0
    %p133 = por %p131, %p132
    %s135 = sadd.s32 %s134, 1
    %p138 = scmp.eq.s32.totalorder %s16, 1
    %p139 = scmp.ne.s32.totalorder %s134, %s136
    %p140 = scmp.eq.s32.totalorder %s16, 0
    %p141 = por %p139, %p140
    %p142 = scmp.ne.s32.totalorder %s134, %s136
    %p143 = scmp.eq.s32.totalorder %s21, 1
    %p144 = por %p142, %p143
    %p145 = scmp.ne.s32.totalorder %s136, %s137
    %p146 = scmp.eq.s32.totalorder %s21, 0
    %p147 = por %p145, %p146
    %p148 = scmp.ne.s32.totalorder %s136, %s137
    %p149 = scmp.eq.s32.totalorder %s22, 1
    %p150 = por %p148, %p149
    %p152 = scmp.ne.s32.totalorder %s137, %s151
    %p153 = scmp.eq.s32.totalorder %s22, 0
    %p154 = por %p152, %p153
    %s156 = sadd.s32 %s155, 1
    %p159 = scmp.eq.s32.totalorder %s16, 1
    %p160 = scmp.ne.s32.totalorder %s155, %s157
    %p161 = scmp.eq.s32.totalorder %s16, 0
    %p162 = por %p160, %p161
    %p163 = scmp.ne.s32.totalorder %s155, %s157
    %p164 = scmp.eq.s32.totalorder %s21, 1
    %p165 = por %p163, %p164
    %p166 = scmp.ne.s32.totalorder %s157, %s158
    %p167 = scmp.eq.s32.totalorder %s21, 0
    %p168 = por %p166, %p167
    %p169 = scmp.ne.s32.totalorder %s157, %s158
    %p170 = scmp.eq.s32.totalorder %s22, 1
    %p171 = por %p169, %p170
    %p173 = scmp.ne.s32.totalorder %s158, %s172
    %p174 = scmp.eq.s32.totalorder %s22, 0
    %p175 = por %p173, %p174
    %s177 = sadd.s32 %s176, 1
    %p180 = scmp.eq.s32.totalorder %s16, 1
    %p181 = scmp.ne.s32.totalorder %s176, %s178
    %p182 = scmp.eq.s32.totalorder %s16, 0
    %p183 = por %p181, %p182
    %p184 = scmp.ne.s32.totalorder %s176, %s178
    %p185 = scmp.eq.s32.totalorder %s21, 1
    %p186 = por %p184, %p185
    %p187 = scmp.ne.s32.totalorder %s178, %s179
    %p188 = scmp.eq.s32.totalorder %s21, 0
    %p189 = por %p187, %p188
    %p190 = scmp.ne.s32.totalorder %s178, %s179
    %p191 = scmp.eq.s32.totalorder %s22, 1
    %p192 = por %p190, %p191
    %p194 = scmp.ne.s32.totalorder %s179, %s193
    %p195 = scmp.eq.s32.totalorder %s22, 0
    %p196 = por %p194, %p195
    %s198 = sadd.s32 %s197, 1
    %p201 = scmp.eq.s32.totalorder %s16, 1
    %p202 = scmp.ne.s32.totalorder %s197, %s199
    %p203 = scmp.eq.s32.totalorder %s16, 0
    %p204 = por %p202, %p203
    %p205 = scmp.ne.s32.totalorder %s197, %s199
    %p206 = scmp.eq.s32.totalorder %s21, 1
    %p207 = por %p205, %p206
    %p208 = scmp.ne.s32.totalorder %s199, %s200
    %p209 = scmp.eq.s32.totalorder %s21, 0
    %p210 = por %p208, %p209
    %p211 = scmp.ne.s32.totalorder %s199, %s200
    %p212 = scmp.eq.s32.totalorder %s22, 1
    %p213 = por %p211, %p212
    %p215 = scmp.ne.s32.totalorder %s200, %s214
    %p216 = scmp.eq.s32.totalorder %s22, 0
    %p217 = por %p215, %p216
    %s219 = sadd.s32 %s218, 1
    %p222 = scmp.eq.s32.totalorder %s16, 1
    %p223 = scmp.ne.s32.totalorder %s218, %s220
    %p224 = scmp.eq.s32.totalorder %s16, 0
    %p225 = por %p223, %p224
    %p226 = scmp.ne.s32.totalorder %s218, %s220
    %p227 = scmp.eq.s32.totalorder %s21, 1
    %p228 = por %p226, %p227
    %p229 = scmp.ne.s32.totalorder %s220, %s221
    %p230 = scmp.eq.s32.totalorder %s21, 0
    %p231 = por %p229, %p230
    %p232 = scmp.ne.s32.totalorder %s220, %s221
    %p233 = scmp.eq.s32.totalorder %s22, 1
    %p234 = por %p232, %p233
    %p236 = scmp.ne.s32.totalorder %s221, %s235
    %p237 = scmp.eq.s32.totalorder %s22, 0
    %p238 = por %p236, %p237
    %s239 = ssub.s32 %s16, %s23
    %p240 = scmp.eq.s32.totalorder %s239, 0
    %s242 = sadd.s32 %s241, 1
    %s243 = scalar_select %p240, %s241, %s242
    %p246 = pneg %p240
    %p247 = scmp.eq.s32.totalorder %s16, 1
    %p248 = por %p246, %p247
    %p249 = scmp.ne.s32.totalorder %s241, %s244
    %p250 = scmp.eq.s32.totalorder %s16, 0
    %p251 = por %p249, %p250
    %p252 = scmp.ne.s32.totalorder %s241, %s244
    %p253 = scmp.eq.s32.totalorder %s21, 1
    %p254 = por %p252, %p253
    %p255 = scmp.ne.s32.totalorder %s244, %s245
    %p256 = scmp.eq.s32.totalorder %s21, 0
    %p257 = por %p255, %p256
    %p258 = scmp.ne.s32.totalorder %s244, %s245
    %p259 = scmp.eq.s32.totalorder %s22, 1
    %p260 = por %p258, %p259
    %p262 = scmp.ne.s32.totalorder %s245, %s261
    %p263 = scmp.eq.s32.totalorder %s22, 0
    %p264 = por %p262, %p263
    %p265 = scmp.le.s32.totalorder 1, %s16
    %p266 = scmp.lt.s32.totalorder %s16, 3
    %p267 = pnand %p265, %p266
    %p268 = pneg %p267
    // Predicated region
    $region9: #{dac_block.1} parent=5 // pred_check
      _
    $region10: #{dac_block.1} parent=5 // pred_check_branch
      %270 = sbr.rel (%p267) target = $region12
    $region11: #{dac_block.1} parent=5 // pred_region
      %s271 = ssub.s32 %s16, 1
      // Predicated region
      $region13: #{dac_block.1} parent=11 // pred_check
        %p272 = pneg %p63
      $region14: #{dac_block.1} parent=11 // pred_check_branch
        %274 = sbr.rel (%p272) target = $region16
      $region15: #{dac_block.1} parent=11 // pred_region
        _
      $region16: #{dac_block.1} parent=11 // pred_fallthru
        _
      // Predicated region
      $region17: #{dac_block.1} parent=11 // pred_check
        %p275 = pneg %p84
      $region18: #{dac_block.1} parent=11 // pred_check_branch
        %277 = sbr.rel (%p275) target = $region20
      $region19: #{dac_block.1} parent=11 // pred_region
        _
      $region20: #{dac_block.1} parent=11 // pred_fallthru
        _
      // Predicated region
      $region21: #{dac_block.1} parent=11 // pred_check
        %p278 = pneg %p105
      $region22: #{dac_block.1} parent=11 // pred_check_branch
        %280 = sbr.rel (%p278) target = $region24
      $region23: #{dac_block.1} parent=11 // pred_region
        _
      $region24: #{dac_block.1} parent=11 // pred_fallthru
        _
      // Predicated region
      $region25: #{dac_block.1} parent=11 // pred_check
        %p281 = pneg %p126
      $region26: #{dac_block.1} parent=11 // pred_check_branch
        %283 = sbr.rel (%p281) target = $region28
      $region27: #{dac_block.1} parent=11 // pred_region
        _
      $region28: #{dac_block.1} parent=11 // pred_fallthru
        _
      // Predicated region
      $region29: #{dac_block.1} parent=11 // pred_check
        %p284 = pneg %p147
      $region30: #{dac_block.1} parent=11 // pred_check_branch
        %286 = sbr.rel (%p284) target = $region32
      $region31: #{dac_block.1} parent=11 // pred_region
        _
      $region32: #{dac_block.1} parent=11 // pred_fallthru
        _
      // Predicated region
      $region33: #{dac_block.1} parent=11 // pred_check
        %p287 = pneg %p168
      $region34: #{dac_block.1} parent=11 // pred_check_branch
        %289 = sbr.rel (%p287) target = $region36
      $region35: #{dac_block.1} parent=11 // pred_region
        _
      $region36: #{dac_block.1} parent=11 // pred_fallthru
        _
      // Predicated region
      $region37: #{dac_block.1} parent=11 // pred_check
        %p290 = pneg %p189
      $region38: #{dac_block.1} parent=11 // pred_check_branch
        %292 = sbr.rel (%p290) target = $region40
      $region39: #{dac_block.1} parent=11 // pred_region
        _
      $region40: #{dac_block.1} parent=11 // pred_fallthru
        _
      // Predicated region
      $region41: #{dac_block.1} parent=11 // pred_check
        %p293 = pneg %p210
      $region42: #{dac_block.1} parent=11 // pred_check_branch
        %295 = sbr.rel (%p293) target = $region44
      $region43: #{dac_block.1} parent=11 // pred_region
        _
      $region44: #{dac_block.1} parent=11 // pred_fallthru
        _
      // Predicated region
      $region45: #{dac_block.1} parent=11 // pred_check
        %p296 = pneg %p231
      $region46: #{dac_block.1} parent=11 // pred_check_branch
        %298 = sbr.rel (%p296) target = $region48
      $region47: #{dac_block.1} parent=11 // pred_region
        _
      $region48: #{dac_block.1} parent=11 // pred_fallthru
        _
    $region12: #{dac_block.1} parent=5 // pred_fallthru
      _
    %p299 = scmp.lt.s32.totalorder %s16, 2
    // Predicated region
    $region49: #{dac_block.1} parent=5 // pred_check
      %p300 = pneg %p299
    $region50: #{dac_block.1} parent=5 // pred_check_branch
      %302 = sbr.rel (%p300) target = $region52
    $region51: #{dac_block.1} parent=5 // pred_region
      // Predicated region
      $region53: #{dac_block.1} parent=51 // pred_check
        %p303 = pneg %p36
      $region54: #{dac_block.1} parent=51 // pred_check_branch
        %305 = sbr.rel (%p303) target = $region56
      $region55: #{dac_block.1} parent=51 // pred_region
        %p306 = scmp.lt.s32.totalorder %s16, 1
        %s307 = scalar_select %p306, %s16, 1
        %s308 = smul.addr %s307, 4
        %s309 = smul.addr %s308, 8
        %s310 = scalar_lea.vmem %s0, %s309
      $region56: #{dac_block.1} parent=51 // pred_fallthru
        _
    $region52: #{dac_block.1} parent=5 // pred_fallthru
      _
    %p311 = scmp.le.s32.totalorder 1, %s16
    %p312 = scmp.lt.s32.totalorder %s16, 3
    %p313 = pnand %p311, %p312
    %p314 = pneg %p313
    // Predicated region
    $region57: #{dac_block.1} parent=5 // pred_check
      _
    $region58: #{dac_block.1} parent=5 // pred_check_branch
      %316 = sbr.rel (%p313) target = $region60
    $region59: #{dac_block.1} parent=5 // pred_region
      %s317 = ssub.s32 %s16, 1
      %p318 = scmp.lt.s32.totalorder %s21, 1
      %s319 = scalar_select %p318, %s21, 1
      %s320 = smul.addr %s319, 4
      %s321 = smul.addr %s320, 8
      %s322 = scalar_lea.vmem %s0, %s321
      %p323 = pneg %p42
      %p324 = pneg %p39
      %p325 = pneg %p63
      %p326 = pneg %p60
      %p327 = pneg %p84
      %p328 = pneg %p81
      %p329 = pneg %p105
      %p330 = pneg %p102
      %p331 = pneg %p126
      %p332 = pneg %p123
      %p333 = pneg %p147
      %p334 = pneg %p144
      %p335 = pneg %p168
      %p336 = pneg %p165
      %p337 = pneg %p189
      %p338 = pneg %p186
      %p339 = pneg %p210
      %p340 = pneg %p207
      %p341 = pneg %p231
      %p342 = pneg %p228
      %p343 = pneg %p257
      %p344 = pneg %p254
      %p345 = scmp.lt.s32.totalorder %s21, 1
      %s346 = scalar_select %p345, %s21, 1
      %s347 = smul.addr %s346, 4
      %s348 = smul.addr %s347, 8
      %s349 = scalar_lea.vmem %s10, %s348
      %p350 = scmp.lt.s32.totalorder %s21, 1
      %s351 = scalar_select %p350, %s21, 1
      %s352 = smul.addr %s351, 4
      %s353 = smul.addr %s352, 8
      %s354 = scalar_lea.vmem %s0, %s353
      %p355 = scmp.lt.s32.totalorder %s21, 1
      %s356 = scalar_select %p355, %s21, 1
      %s357 = smul.addr %s356, 4
      %s358 = smul.addr %s357, 8
      %s359 = scalar_lea.vmem %s10, %s358
      %v361 = vld [vmem:[%s354] sm:$0xff]
      %v362 = vld [vmem:[%s354 + $0x8] sm:$0xff]
      %v363 = vld [vmem:[%s354 + $0x10] sm:$0xff]
      %v364 = vld [vmem:[%s354 + $0x18] sm:$0xff]
      %v365 = vld [vmem:[%s1] sm:$0xf]
      %vm366 = vcmask 1043472
      %vm367 = vcmask 72708
      %vm368 = vmor %vm367, %vm366
      %369 = vst.msk [vmem:[#allocation2 + $0x4] sm:$0xff] %vm368, 0
      %vm370 = vcmask 1043528
      %vm371 = vcmask 130052
      %vm372 = vmor %vm371, %vm370
      %373 = vst.msk [vmem:[#allocation2 + $0x18] sm:$0xff] %vm372, 0
      %v374 = vpack.c.bf16 %v361, %v361
      %v375 = vpack.c.bf16 %v362, %v362
      %v376 = vpack.c.bf16 %v363, %v363
      %v377 = vpack.c.bf16 %v364, %v364
      %v382 = vunpack.c.l.b16 %v374
      %v383 = vunpack.c.l.b16 %v375
      %v384 = vunpack.c.l.b16 %v376
      %v385 = vunpack.c.l.b16 %v377
      %v386 = vpack.c.b16 %v383, %v382
      %v387 = vpack.c.b16 %v385, %v384
      %388 = vrot.lane.b32.xlu0 %v386, 9
      %v389 = vpop.permute.xlu0 %388
      %390 = vrot.lane.b32.xlu0 %v387, 9
      %v391 = vpop.permute.xlu0 %390
      %v392 = vrot.slane %v389, 4
      %v393 = vrot.slane %v391, 4
      %vm394 = vcmask 72704
      %v395 = vsel %vm394, %v392, %v389
      %vm396 = vcmask 1043456
      %v397 = vsel %vm396, %v392, %v393
      %v398 = vsel %vm394, %v397, %v391
      %vm402 = vcmask 1047556
      %vm403 = vmor %vm402, %vm370
      %404 = vst.msk [vmem:[#allocation2 + $0x8] sm:$0xff] %vm403, %v395
      %405 = vst [vmem:[#allocation2 + $0x10] sm:$0xff] %v398
      %vm406 = vcmask 68608
      %407 = vst.msk [vmem:[#allocation2 + $0x18] sm:$0xf] %vm406, %v393
      %v408 = vld [vmem:[#allocation2 + $0x4] sm:$0xff]
      %v409 = vld [vmem:[#allocation2 + $0xc] sm:$0xff]
      %v410 = vld [vmem:[#allocation2 + $0x14] sm:$0xf]
      %414 = vrot.lane.b32.xlu0 %v408, 18
      %v415 = vpop.permute.xlu0 %414
      %416 = vrot.lane.b32.xlu0 %v409, 18
      %v417 = vpop.permute.xlu0 %416
      %418 = vrot.lane.b32.xlu0 %v410, 18
      %v419 = vpop.permute.xlu0 %418
      %v420 = vrot.slane %v415, 4
      %v421 = vrot.slane %v417, 4
      %v422 = vrot.slane %v419, 4
      %v423 = vsel %vm396, %v420, %v421
      %vm424 = vcmask 146432
      %v425 = vsel %vm424, %v415, %v423
      %v426 = vsel %vm396, %v421, %v422
      %v427 = vsel %vm424, %v417, %v426
      %430 = vst [vmem:[#allocation3] sm:$0xff] %v425
      %431 = vst [vmem:[#allocation3 + $0x8] sm:$0xff] %v427
      %v432 = vld [vmem:[#allocation2 + $0x4] sm:$0xff]
      %v433 = vld [vmem:[#allocation2 + $0xc] sm:$0xff]
      %v434 = vld [vmem:[#allocation2 + $0x14] sm:$0xf]
      %438 = vrot.lane.b32.xlu0 %v432, 17
      %v439 = vpop.permute.xlu0 %438
      %440 = vrot.lane.b32.xlu0 %v433, 17
      %v441 = vpop.permute.xlu0 %440
      %442 = vrot.lane.b32.xlu0 %v434, 17
      %v443 = vpop.permute.xlu0 %442
      %v444 = vrot.slane %v439, 4
      %v445 = vrot.slane %v441, 4
      %v446 = vrot.slane %v443, 4
      %v447 = vsel %vm396, %v444, %v445
      %vm448 = vcmask 138240
      %v449 = vsel %vm448, %v439, %v447
      %v450 = vsel %vm396, %v445, %v446
      %v451 = vsel %vm448, %v441, %v450
      %454 = vst [vmem:[#allocation3 + $0x10] sm:$0xff] %v449
      %455 = vst [vmem:[#allocation3 + $0x18] sm:$0xff] %v451
      %v456 = vld [vmem:[#allocation2 + $0x4] sm:$0xff]
      %v457 = vld [vmem:[#allocation2 + $0xc] sm:$0xff]
      %v458 = vld [vmem:[#allocation2 + $0x14] sm:$0xf]
      %462 = vrot.lane.b32.xlu0 %v456, 16
      %v463 = vpop.permute.xlu0 %462
      %464 = vrot.lane.b32.xlu0 %v457, 16
      %v465 = vpop.permute.xlu0 %464
      %466 = vrot.lane.b32.xlu0 %v458, 16
      %v467 = vpop.permute.xlu0 %466
      %v468 = vrot.slane %v463, 4
      %v469 = vrot.slane %v465, 4
      %v470 = vrot.slane %v467, 4
      %v471 = vsel %vm396, %v468, %v469
      %vm472 = vcmask 130048
      %v473 = vsel %vm472, %v463, %v471
      %v474 = vsel %vm396, %v469, %v470
      %v475 = vsel %vm472, %v465, %v474
      %478 = vst [vmem:[#allocation3 + $0x20] sm:$0xff] %v473
      %479 = vst [vmem:[#allocation3 + $0x28] sm:$0xff] %v475
      %v480 = vld [vmem:[#allocation2 + $0x8] sm:$0xff]
      %v481 = vld [vmem:[#allocation2 + $0x10] sm:$0xff]
      %v482 = vld [vmem:[#allocation2 + $0x18] sm:$0xf]
      %486 = vrot.lane.b32.xlu0 %v480, 120
      %v487 = vpop.permute.xlu0 %486
      %488 = vrot.lane.b32.xlu0 %v481, 120
      %v489 = vpop.permute.xlu0 %488
      %490 = vrot.lane.b32.xlu0 %v482, 120
      %v491 = vpop.permute.xlu0 %490
      %v492 = vrot.slane %v487, 4
      %v493 = vrot.slane %v489, 4
      %v494 = vrot.slane %v491, 4
      %v495 = vsel %vm396, %v492, %v493
      %vm496 = vcmask 982016
      %v497 = vsel %vm496, %v487, %v495
      %v498 = vsel %vm396, %v493, %v494
      %v499 = vsel %vm496, %v489, %v498
      %502 = vst [vmem:[#allocation3 + $0x30] sm:$0xff] %v497
      %503 = vst [vmem:[#allocation3 + $0x38] sm:$0xff] %v499
      %v504 = vld [vmem:[#allocation2 + $0x8] sm:$0xff]
      %v505 = vld [vmem:[#allocation2 + $0x10] sm:$0xff]
      %v506 = vld [vmem:[#allocation2 + $0x18] sm:$0xf]
      %510 = vrot.lane.b32.xlu0 %v504, 119
      %v511 = vpop.permute.xlu0 %510
      %512 = vrot.lane.b32.xlu0 %v505, 119
      %v513 = vpop.permute.xlu0 %512
      %514 = vrot.lane.b32.xlu0 %v506, 119
      %v515 = vpop.permute.xlu0 %514
      %v516 = vrot.slane %v511, 4
      %v517 = vrot.slane %v513, 4
      %v518 = vrot.slane %v515, 4
      %v519 = vsel %vm396, %v516, %v517
      %vm520 = vcmask 973824
      %v521 = vsel %vm520, %v511, %v519
      %v522 = vsel %vm396, %v517, %v518
      %v523 = vsel %vm520, %v513, %v522
      %526 = vst [vmem:[#allocation3 + $0x40] sm:$0xff] %v521
      %527 = vst [vmem:[#allocation3 + $0x48] sm:$0xff] %v523
      %v528 = vld [vmem:[#allocation2 + $0x8] sm:$0xff]
      %v529 = vld [vmem:[#allocation2 + $0x10] sm:$0xff]
      %v530 = vld [vmem:[#allocation2 + $0x18] sm:$0xf]
      %534 = vrot.lane.b32.xlu0 %v528, 118
      %v535 = vpop.permute.xlu0 %534
      %536 = vrot.lane.b32.xlu0 %v529, 118
      %v537 = vpop.permute.xlu0 %536
      %538 = vrot.lane.b32.xlu0 %v530, 118
      %v539 = vpop.permute.xlu0 %538
      %v540 = vrot.slane %v535, 4
      %v541 = vrot.slane %v537, 4
      %v542 = vrot.slane %v539, 4
      %v543 = vsel %vm396, %v540, %v541
      %vm544 = vcmask 965632
      %v545 = vsel %vm544, %v535, %v543
      %v546 = vsel %vm396, %v541, %v542
      %v547 = vsel %vm544, %v537, %v546
      %550 = vst [vmem:[#allocation3 + $0x50] sm:$0xff] %v545
      %551 = vst [vmem:[#allocation3 + $0x58] sm:$0xff] %v547
      %v552 = vld [vmem:[#allocation2 + $0x8] sm:$0xff]
      %v553 = vld [vmem:[#allocation2 + $0x10] sm:$0xff]
      %v554 = vld [vmem:[#allocation2 + $0x18] sm:$0xf]
      %558 = vrot.lane.b32.xlu0 %v552, 94
      %v559 = vpop.permute.xlu0 %558
      %560 = vrot.lane.b32.xlu0 %v553, 94
      %v561 = vpop.permute.xlu0 %560
      %562 = vrot.lane.b32.xlu0 %v554, 94
      %v563 = vpop.permute.xlu0 %562
      %v564 = vrot.slane %v559, 4
      %v565 = vrot.slane %v561, 4
      %v566 = vrot.slane %v563, 4
      %v567 = vsel %vm396, %v564, %v565
      %vm568 = vcmask 769024
      %v569 = vsel %vm568, %v559, %v567
      %v570 = vsel %vm396, %v565, %v566
      %v571 = vsel %vm568, %v561, %v570
      %574 = vst [vmem:[#allocation3 + $0x60] sm:$0xff] %v569
      %575 = vst [vmem:[#allocation3 + $0x68] sm:$0xff] %v571
      %v576 = vld [vmem:[#allocation2 + $0x8] sm:$0xff]
      %v577 = vld [vmem:[#allocation2 + $0x10] sm:$0xff]
      %v578 = vld [vmem:[#allocation2 + $0x18] sm:$0xf]
      %582 = vrot.lane.b32.xlu0 %v576, 93
      %v583 = vpop.permute.xlu0 %582
      %584 = vrot.lane.b32.xlu0 %v577, 93
      %v585 = vpop.permute.xlu0 %584
      %586 = vrot.lane.b32.xlu0 %v578, 93
      %v587 = vpop.permute.xlu0 %586
      %v588 = vrot.slane %v583, 4
      %v589 = vrot.slane %v585, 4
      %v590 = vrot.slane %v587, 4
      %v591 = vsel %vm396, %v588, %v589
      %vm592 = vcmask 760832
      %v593 = vsel %vm592, %v583, %v591
      %v594 = vsel %vm396, %v589, %v590
      %v595 = vsel %vm592, %v585, %v594
      %598 = vst [vmem:[#allocation3 + $0x70] sm:$0xff] %v593
      %599 = vst [vmem:[#allocation3 + $0x78] sm:$0xff] %v595
      %v600 = vld [vmem:[#allocation2 + $0x8] sm:$0xff]
      %v601 = vld [vmem:[#allocation2 + $0x10] sm:$0xff]
      %v602 = vld [vmem:[#allocation2 + $0x18] sm:$0xf]
      %606 = vrot.lane.b32.xlu0 %v600, 92
      %v607 = vpop.permute.xlu0 %606
      %608 = vrot.lane.b32.xlu0 %v601, 92
      %v609 = vpop.permute.xlu0 %608
      %610 = vrot.lane.b32.xlu0 %v602, 92
      %v611 = vpop.permute.xlu0 %610
      %v612 = vrot.slane %v607, 4
      %v613 = vrot.slane %v609, 4
      %v614 = vrot.slane %v611, 4
      %v615 = vsel %vm396, %v612, %v613
      %vm616 = vcmask 752640
      %v617 = vsel %vm616, %v607, %v615
      %v618 = vsel %vm396, %v613, %v614
      %v619 = vsel %vm616, %v609, %v618
      %622 = vst [vmem:[#allocation3 + $0x80] sm:$0xff] %v617
      %623 = vst [vmem:[#allocation3 + $0x88] sm:$0xff] %v619
      %v624 = vld [vmem:[%s2] sm:$0xf]
      %v625 = vld [vmem:[#allocation3] sm:$0xff]
      %v626 = vld [vmem:[#allocation3 + $0x8] sm:$0xff]
      %v627 = vld [vmem:[#allocation3 + $0x10] sm:$0xff]
      %v628 = vld [vmem:[#allocation3 + $0x18] sm:$0xff]
      %v629 = vld [vmem:[#allocation3 + $0x20] sm:$0xff]
      %v630 = vld [vmem:[#allocation3 + $0x28] sm:$0xff]
      %v631 = vld [vmem:[#allocation3 + $0x30] sm:$0xff]
      %v632 = vld [vmem:[#allocation3 + $0x38] sm:$0xff]
      %v633 = vld [vmem:[#allocation3 + $0x40] sm:$0xff]
      %v634 = vld [vmem:[#allocation3 + $0x48] sm:$0xff]
      %v635 = vld [vmem:[#allocation3 + $0x50] sm:$0xff]
      %v636 = vld [vmem:[#allocation3 + $0x58] sm:$0xff]
      %v637 = vld [vmem:[#allocation3 + $0x60] sm:$0xff]
      %v638 = vld [vmem:[#allocation3 + $0x68] sm:$0xff]
      %v639 = vld [vmem:[#allocation3 + $0x70] sm:$0xff]
      %v640 = vld [vmem:[#allocation3 + $0x78] sm:$0xff]
      %v641 = vld [vmem:[#allocation3 + $0x80] sm:$0xff]
      %v642 = vld [vmem:[#allocation3 + $0x88] sm:$0xff]
      %v643 = vld [vmem:[%s6] sm:$0xff]
      %645 = vset.pattern.permute.xlu0 0
      %646 = vperm.xlu0 %645, %v643
      %v647 = vpop.permute.xlu0 %646
      %v667 = vunpack.c.l.b16 %v625
      %v668 = vunpack.c.h.b16 %v625
      %v669 = vunpack.c.l.b16 %v626
      %v670 = vunpack.c.h.b16 %v626
      %v671 = vunpack.c.l.b16 %v627
      %v672 = vunpack.c.h.b16 %v627
      %v673 = vunpack.c.l.b16 %v628
      %v674 = vunpack.c.h.b16 %v628
      %v675 = vunpack.c.l.b16 %v629
      %v676 = vunpack.c.h.b16 %v629
      %v677 = vunpack.c.l.b16 %v630
      %v678 = vunpack.c.h.b16 %v630
      %v679 = vunpack.c.l.b16 %v631
      %v680 = vunpack.c.h.b16 %v631
      %v681 = vunpack.c.l.b16 %v632
      %v682 = vunpack.c.h.b16 %v632
      %v683 = vunpack.c.l.b16 %v633
      %v684 = vunpack.c.h.b16 %v633
      %v685 = vunpack.c.l.b16 %v634
      %v686 = vunpack.c.h.b16 %v634
      %v687 = vunpack.c.l.b16 %v635
      %v688 = vunpack.c.h.b16 %v635
      %v689 = vunpack.c.l.b16 %v636
      %v690 = vunpack.c.h.b16 %v636
      %v691 = vunpack.c.l.b16 %v637
      %v692 = vunpack.c.h.b16 %v637
      %v693 = vunpack.c.l.b16 %v638
      %v694 = vunpack.c.h.b16 %v638
      %v695 = vunpack.c.l.b16 %v639
      %v696 = vunpack.c.h.b16 %v639
      %v697 = vunpack.c.l.b16 %v640
      %v698 = vunpack.c.h.b16 %v640
      %v699 = vunpack.c.l.b16 %v641
      %v700 = vunpack.c.h.b16 %v641
      %v701 = vunpack.c.l.b16 %v642
      %v702 = vunpack.c.h.b16 %v642
      %v703 = vpack.c.b16 %v671, %v667
      %v704 = vpack.c.b16 %v672, %v668
      %v705 = vpack.c.b16 %v673, %v669
      %v706 = vpack.c.b16 %v674, %v670
      %v707 = vpack.c.b16 %v679, %v675
      %v708 = vpack.c.b16 %v680, %v676
      %v709 = vpack.c.b16 %v681, %v677
      %v710 = vpack.c.b16 %v682, %v678
      %v711 = vpack.c.b16 %v687, %v683
      %v712 = vpack.c.b16 %v688, %v684
      %v713 = vpack.c.b16 %v689, %v685
      %v714 = vpack.c.b16 %v690, %v686
      %v715 = vpack.c.b16 %v695, %v691
      %v716 = vpack.c.b16 %v696, %v692
      %v717 = vpack.c.b16 %v697, %v693
      %v718 = vpack.c.b16 %v698, %v694
      %v719 = vpack.c.b16 %v699, %v699
      %v720 = vpack.c.b16 %v700, %v700
      %v721 = vpack.c.b16 %v701, %v701
      %v722 = vpack.c.b16 %v702, %v702
      %vm739 = vcmask 588800
      %v741 = vsel %vm739, %v624, 0
      %vm743 = vcmask 1043456
      %v745 = vsel %vm743, %v719, 0
      %v748 = vsel %vm743, %v720, 0
      %v751 = vsel %vm743, %v721, 0
      %v754 = vsel %vm743, %v722, 0
      %756 = vmatprep.subr.bf16.mxu0 0
      %757 = vmatpush1.bf16.msra.mxu0 0
      %758 = vmatprep.subr.bf16.mxu0 0
      %759 = vmatpush1.bf16.msra.mxu0 0
      %760 = vmatprep.subr.bf16.mxu0 0
      %761 = vmatpush1.bf16.msra.mxu0 0
      %762 = vmatprep.subr.bf16.mxu0 %v748
      %763 = vmatpush1.bf16.msra.mxu0 %v745
      %764 = vmatprep.subr.bf16.mxu0 %v716
      %765 = vmatpush1.bf16.msra.mxu0 %v715
      %766 = vmatprep.subr.bf16.mxu0 %v712
      %767 = vmatpush1.bf16.msra.mxu0 %v711
      %768 = vmatprep.subr.bf16.mxu0 %v708
      %769 = vmatpush1.bf16.msra.mxu0 %v707
      %770 = vmatprep.subr.bf16.mxu0 %v704
      %771 = vmatpush1.bf16.msra.mxu0 %v703
      %772 = vmatprep.subr.bf16.mxu0 0
      %773 = vmatpush2.bf16.msra.mxu0 0
      %774 = vmatprep.subr.bf16.mxu0 0
      %775 = vmatpush2.bf16.msra.mxu0 0
      %776 = vmatprep.subr.bf16.mxu0 0
      %777 = vmatpush2.bf16.msra.mxu0 0
      %778 = vmatprep.subr.bf16.mxu0 0
      %779 = vmatpush2.bf16.msra.mxu0 0
      %780 = vmatprep.subr.bf16.mxu0 0
      %781 = vmatpush2.bf16.msra.mxu0 0
      %782 = vmatprep.subr.bf16.mxu0 0
      %783 = vmatpush2.bf16.msra.mxu0 0
      %784 = vmatprep.subr.bf16.mxu0 0
      %785 = vmatpush2.bf16.msra.mxu0 0
      %786 = vmatprep.subr.bf16.mxu0 0
      %787 = vmatpush2.bf16.msra.mxu0 0
      %788 = vmatprep.mubr.bf16.mxu0 0
      %789 = vmatmul.mubr.bf16.gmra.mxu0 %v741
      %v790 = vpop.f32.mrf.mxu0
      %v791 = vadd.f32 %v647, %v790
      %v792 = vpop.f32.mrf.mxu0
      %v793 = vadd.f32 %v647, %v792
      %v794 = vpop.f32.mrf.mxu0
      %v795 = vpop.f32.mrf.mxu0
      %796 = vdwg.mxu0
      %797 = vmatprep.subr.bf16.mxu0 0
      %798 = vmatpush1.bf16.msra.mxu0 0
      %799 = vmatprep.subr.bf16.mxu0 0
      %800 = vmatpush1.bf16.msra.mxu0 0
      %801 = vmatprep.subr.bf16.mxu0 0
      %802 = vmatpush1.bf16.msra.mxu0 0
      %803 = vmatprep.subr.bf16.mxu0 %v754
      %804 = vmatpush1.bf16.msra.mxu0 %v751
      %805 = vmatprep.subr.bf16.mxu0 %v718
      %806 = vmatpush1.bf16.msra.mxu0 %v717
      %807 = vmatprep.subr.bf16.mxu0 %v714
      %808 = vmatpush1.bf16.msra.mxu0 %v713
      %809 = vmatprep.subr.bf16.mxu0 %v710
      %810 = vmatpush1.bf16.msra.mxu0 %v709
      %811 = vmatprep.subr.bf16.mxu0 %v706
      %812 = vmatpush1.bf16.msra.mxu0 %v705
      %813 = vmatprep.subr.bf16.mxu0 0
      %814 = vmatpush2.bf16.msra.mxu0 0
      %815 = vmatprep.subr.bf16.mxu0 0
      %816 = vmatpush2.bf16.msra.mxu0 0
      %817 = vmatprep.subr.bf16.mxu0 0
      %818 = vmatpush2.bf16.msra.mxu0 0
      %819 = vmatprep.subr.bf16.mxu0 0
      %820 = vmatpush2.bf16.msra.mxu0 0
      %821 = vmatprep.subr.bf16.mxu0 0
      %822 = vmatpush2.bf16.msra.mxu0 0
      %823 = vmatprep.subr.bf16.mxu0 0
      %824 = vmatpush2.bf16.msra.mxu0 0
      %825 = vmatprep.subr.bf16.mxu0 0
      %826 = vmatpush2.bf16.msra.mxu0 0
      %827 = vmatprep.subr.bf16.mxu0 0
      %828 = vmatpush2.bf16.msra.mxu0 0
      %829 = vmatprep.mubr.bf16.mxu0 0
      %830 = vmatmul.mubr.bf16.gmra.mxu0 %v741
      %v831 = vpop.f32.mrf.mxu0
      %v832 = vadd.f32 %v647, %v831
      %v833 = vpop.f32.mrf.mxu0
      %v834 = vadd.f32 %v647, %v833
      %v835 = vpop.f32.mrf.mxu0
      %v836 = vpop.f32.mrf.mxu0
      %837 = vdwg.mxu0
      %v838 = vld [vmem:[#allocation2 + $0x4] sm:$0xff]
      %v839 = vld [vmem:[#allocation2 + $0xc] sm:$0xff]
      %v840 = vld [vmem:[#allocation2 + $0x14] sm:$0xf]
      %844 = vrot.lane.b32.xlu0 %v838, 72
      %v845 = vpop.permute.xlu0 %844
      %846 = vrot.lane.b32.xlu0 %v839, 72
      %v847 = vpop.permute.xlu0 %846
      %848 = vrot.lane.b32.xlu0 %v840, 72
      %v849 = vpop.permute.xlu0 %848
      %v850 = vrot.slane %v845, 4
      %v851 = vrot.slane %v847, 4
      %v852 = vrot.slane %v849, 4
      %v853 = vsel %vm396, %v850, %v851
      %vm854 = vcmask 588800
      %v855 = vsel %vm854, %v845, %v853
      %v856 = vsel %vm396, %v851, %v852
      %v857 = vsel %vm854, %v847, %v856
      %860 = vst [vmem:[#allocation3] sm:$0xff] %v855
      %861 = vst [vmem:[#allocation3 + $0x8] sm:$0xff] %v857
      %v862 = vld [vmem:[#allocation2 + $0x4] sm:$0xff]
      %v863 = vld [vmem:[#allocation2 + $0xc] sm:$0xff]
      %v864 = vld [vmem:[#allocation2 + $0x14] sm:$0xf]
      %868 = vrot.lane.b32.xlu0 %v862, 69
      %v869 = vpop.permute.xlu0 %868
      %870 = vrot.lane.b32.xlu0 %v863, 69
      %v871 = vpop.permute.xlu0 %870
      %872 = vrot.lane.b32.xlu0 %v864, 69
      %v873 = vpop.permute.xlu0 %872
      %v874 = vrot.slane %v869, 4
      %v875 = vrot.slane %v871, 4
      %v876 = vrot.slane %v873, 4
      %v877 = vsel %vm396, %v874, %v875
      %vm878 = vcmask 564224
      %v879 = vsel %vm878, %v869, %v877
      %v880 = vsel %vm396, %v875, %v876
      %v881 = vsel %vm878, %v871, %v880
      %884 = vst [vmem:[#allocation3 + $0x10] sm:$0xff] %v879
      %885 = vst [vmem:[#allocation3 + $0x18] sm:$0xff] %v881
      %v886 = vld [vmem:[#allocation2 + $0x4] sm:$0xff]
      %v887 = vld [vmem:[#allocation2 + $0xc] sm:$0xff]
      %v888 = vld [vmem:[#allocation2 + $0x14] sm:$0xf]
      %892 = vrot.lane.b32.xlu0 %v886, 66
      %v893 = vpop.permute.xlu0 %892
      %894 = vrot.lane.b32.xlu0 %v887, 66
      %v895 = vpop.permute.xlu0 %894
      %896 = vrot.lane.b32.xlu0 %v888, 66
      %v897 = vpop.permute.xlu0 %896
      %v898 = vrot.slane %v893, 4
      %v899 = vrot.slane %v895, 4
      %v900 = vrot.slane %v897, 4
      %v901 = vsel %vm396, %v898, %v899
      %vm902 = vcmask 539648
      %v903 = vsel %vm902, %v893, %v901
      %v904 = vsel %vm396, %v899, %v900
      %v905 = vsel %vm902, %v895, %v904
      %908 = vst [vmem:[#allocation3 + $0x20] sm:$0xff] %v903
      %909 = vst [vmem:[#allocation3 + $0x28] sm:$0xff] %v905
      %v910 = vld [vmem:[#allocation2 + $0x8] sm:$0xff]
      %v911 = vld [vmem:[#allocation2 + $0x10] sm:$0xff]
      %v912 = vld [vmem:[#allocation2 + $0x18] sm:$0xf]
      %916 = vrot.lane.b32.xlu0 %v910, 122
      %v917 = vpop.permute.xlu0 %916
      %918 = vrot.lane.b32.xlu0 %v911, 122
      %v919 = vpop.permute.xlu0 %918
      %920 = vrot.lane.b32.xlu0 %v912, 122
      %v921 = vpop.permute.xlu0 %920
      %v922 = vrot.slane %v917, 4
      %v923 = vrot.slane %v919, 4
      %v924 = vrot.slane %v921, 4
      %v925 = vsel %vm396, %v922, %v923
      %vm926 = vcmask 998400
      %v927 = vsel %vm926, %v917, %v925
      %v928 = vsel %vm396, %v923, %v924
      %v929 = vsel %vm926, %v919, %v928
      %932 = vst [vmem:[#allocation3 + $0x30] sm:$0xff] %v927
      %933 = vst [vmem:[#allocation3 + $0x38] sm:$0xff] %v929
      %v934 = vld [vmem:[#allocation2 + $0x8] sm:$0xff]
      %v935 = vld [vmem:[#allocation2 + $0x10] sm:$0xff]
      %v936 = vld [vmem:[#allocation2 + $0x18] sm:$0xf]
      %940 = vrot.lane.b32.xlu0 %v934, 119
      %v941 = vpop.permute.xlu0 %940
      %942 = vrot.lane.b32.xlu0 %v935, 119
      %v943 = vpop.permute.xlu0 %942
      %944 = vrot.lane.b32.xlu0 %v936, 119
      %v945 = vpop.permute.xlu0 %944
      %v946 = vrot.slane %v941, 4
      %v947 = vrot.slane %v943, 4
      %v948 = vrot.slane %v945, 4
      %v949 = vsel %vm396, %v946, %v947
      %v950 = vsel %vm520, %v941, %v949
      %v951 = vsel %vm396, %v947, %v948
      %v952 = vsel %vm520, %v943, %v951
      %955 = vst [vmem:[#allocation3 + $0x40] sm:$0xff] %v950
      %956 = vst [vmem:[#allocation3 + $0x48] sm:$0xff] %v952
      %v957 = vld [vmem:[#allocation2 + $0x8] sm:$0xff]
      %v958 = vld [vmem:[#allocation2 + $0x10] sm:$0xff]
      %v959 = vld [vmem:[#allocation2 + $0x18] sm:$0xf]
      %963 = vrot.lane.b32.xlu0 %v957, 116
      %v964 = vpop.permute.xlu0 %963
      %965 = vrot.lane.b32.xlu0 %v958, 116
      %v966 = vpop.permute.xlu0 %965
      %967 = vrot.lane.b32.xlu0 %v959, 116
      %v968 = vpop.permute.xlu0 %967
      %v969 = vrot.slane %v964, 4
      %v970 = vrot.slane %v966, 4
      %v971 = vrot.slane %v968, 4
      %v972 = vsel %vm396, %v969, %v970
      %vm973 = vcmask 949248
      %v974 = vsel %vm973, %v964, %v972
      %v975 = vsel %vm396, %v970, %v971
      %v976 = vsel %vm973, %v966, %v975
      %979 = vst [vmem:[#allocation3 + $0x50] sm:$0xff] %v974
      %980 = vst [vmem:[#allocation3 + $0x58] sm:$0xff] %v976
      %v981 = vld [vmem:[#allocation2 + $0x8] sm:$0xff]
      %v982 = vld [vmem:[#allocation2 + $0x10] sm:$0xff]
      %v983 = vld [vmem:[#allocation2 + $0x18] sm:$0xf]
      %987 = vrot.lane.b32.xlu0 %v981, 44
      %v988 = vpop.permute.xlu0 %987
      %989 = vrot.lane.b32.xlu0 %v982, 44
      %v990 = vpop.permute.xlu0 %989
      %991 = vrot.lane.b32.xlu0 %v983, 44
      %v992 = vpop.permute.xlu0 %991
      %v993 = vrot.slane %v988, 4
      %v994 = vrot.slane %v990, 4
      %v995 = vrot.slane %v992, 4
      %v996 = vsel %vm396, %v993, %v994
      %vm997 = vcmask 359424
      %v998 = vsel %vm997, %v988, %v996
      %v999 = vsel %vm396, %v994, %v995
      %v1000 = vsel %vm997, %v990, %v999
      %1003 = vst [vmem:[#allocation3 + $0x60] sm:$0xff] %v998
      %1004 = vst [vmem:[#allocation3 + $0x68] sm:$0xff] %v1000
      %v1005 = vld [vmem:[#allocation2 + $0x8] sm:$0xff]
      %v1006 = vld [vmem:[#allocation2 + $0x10] sm:$0xff]
      %v1007 = vld [vmem:[#allocation2 + $0x18] sm:$0xf]
      %1011 = vrot.lane.b32.xlu0 %v1005, 41
      %v1012 = vpop.permute.xlu0 %1011
      %1013 = vrot.lane.b32.xlu0 %v1006, 41
      %v1014 = vpop.permute.xlu0 %1013
      %1015 = vrot.lane.b32.xlu0 %v1007, 41
      %v1016 = vpop.permute.xlu0 %1015
      %v1017 = vrot.slane %v1012, 4
      %v1018 = vrot.slane %v1014, 4
      %v1019 = vrot.slane %v1016, 4
      %v1020 = vsel %vm396, %v1017, %v1018
      %vm1021 = vcmask 334848
      %v1022 = vsel %vm1021, %v1012, %v1020
      %v1023 = vsel %vm396, %v1018, %v1019
      %v1024 = vsel %vm1021, %v1014, %v1023
      %1027 = vst [vmem:[#allocation3 + $0x70] sm:$0xff] %v1022
      %1028 = vst [vmem:[#allocation3 + $0x78] sm:$0xff] %v1024
      %v1029 = vld [vmem:[#allocation2 + $0x8] sm:$0xff]
      %v1030 = vld [vmem:[#allocation2 + $0x10] sm:$0xff]
      %v1031 = vld [vmem:[#allocation2 + $0x18] sm:$0xf]
      %1035 = vrot.lane.b32.xlu0 %v1029, 38
      %v1036 = vpop.permute.xlu0 %1035
      %1037 = vrot.lane.b32.xlu0 %v1030, 38
      %v1038 = vpop.permute.xlu0 %1037
      %1039 = vrot.lane.b32.xlu0 %v1031, 38
      %v1040 = vpop.permute.xlu0 %1039
      %v1041 = vrot.slane %v1036, 4
      %v1042 = vrot.slane %v1038, 4
      %v1043 = vrot.slane %v1040, 4
      %v1044 = vsel %vm396, %v1041, %v1042
      %vm1045 = vcmask 310272
      %v1046 = vsel %vm1045, %v1036, %v1044
      %v1047 = vsel %vm396, %v1042, %v1043
      %v1048 = vsel %vm1045, %v1038, %v1047
      %1051 = vst [vmem:[#allocation3 + $0x80] sm:$0xff] %v1046
      %1052 = vst [vmem:[#allocation3 + $0x88] sm:$0xff] %v1048
      %v1053 = vld [vmem:[%s3] sm:$0xf]
      %v1054 = vld [vmem:[#allocation3] sm:$0xff]
      %v1055 = vld [vmem:[#allocation3 + $0x8] sm:$0xff]
      %v1056 = vld [vmem:[#allocation3 + $0x10] sm:$0xff]
      %v1057 = vld [vmem:[#allocation3 + $0x18] sm:$0xff]
      %v1058 = vld [vmem:[#allocation3 + $0x20] sm:$0xff]
      %v1059 = vld [vmem:[#allocation3 + $0x28] sm:$0xff]
      %v1060 = vld [vmem:[#allocation3 + $0x30] sm:$0xff]
      %v1061 = vld [vmem:[#allocation3 + $0x38] sm:$0xff]
      %v1062 = vld [vmem:[#allocation3 + $0x40] sm:$0xff]
      %v1063 = vld [vmem:[#allocation3 + $0x48] sm:$0xff]
      %v1064 = vld [vmem:[#allocation3 + $0x50] sm:$0xff]
      %v1065 = vld [vmem:[#allocation3 + $0x58] sm:$0xff]
      %v1066 = vld [vmem:[#allocation3 + $0x60] sm:$0xff]
      %v1067 = vld [vmem:[#allocation3 + $0x68] sm:$0xff]
      %v1068 = vld [vmem:[#allocation3 + $0x70] sm:$0xff]
      %v1069 = vld [vmem:[#allocation3 + $0x78] sm:$0xff]
      %v1070 = vld [vmem:[#allocation3 + $0x80] sm:$0xff]
      %v1071 = vld [vmem:[#allocation3 + $0x88] sm:$0xff]
      %v1072 = vld [vmem:[%s7] sm:$0xff]
      %1074 = vset.pattern.permute.xlu0 0
      %1075 = vperm.xlu0 %1074, %v1072
      %v1076 = vpop.permute.xlu0 %1075
      %v1096 = vunpack.c.l.b16 %v1054
      %v1097 = vunpack.c.h.b16 %v1054
      %v1098 = vunpack.c.l.b16 %v1055
      %v1099 = vunpack.c.h.b16 %v1055
      %v1100 = vunpack.c.l.b16 %v1056
      %v1101 = vunpack.c.h.b16 %v1056
      %v1102 = vunpack.c.l.b16 %v1057
      %v1103 = vunpack.c.h.b16 %v1057
      %v1104 = vunpack.c.l.b16 %v1058
      %v1105 = vunpack.c.h.b16 %v1058
      %v1106 = vunpack.c.l.b16 %v1059
      %v1107 = vunpack.c.h.b16 %v1059
      %v1108 = vunpack.c.l.b16 %v1060
      %v1109 = vunpack.c.h.b16 %v1060
      %v1110 = vunpack.c.l.b16 %v1061
      %v1111 = vunpack.c.h.b16 %v1061
      %v1112 = vunpack.c.l.b16 %v1062
      %v1113 = vunpack.c.h.b16 %v1062
      %v1114 = vunpack.c.l.b16 %v1063
      %v1115 = vunpack.c.h.b16 %v1063
      %v1116 = vunpack.c.l.b16 %v1064
      %v1117 = vunpack.c.h.b16 %v1064
      %v1118 = vunpack.c.l.b16 %v1065
      %v1119 = vunpack.c.h.b16 %v1065
      %v1120 = vunpack.c.l.b16 %v1066
      %v1121 = vunpack.c.h.b16 %v1066
      %v1122 = vunpack.c.l.b16 %v1067
      %v1123 = vunpack.c.h.b16 %v1067
      %v1124 = vunpack.c.l.b16 %v1068
      %v1125 = vunpack.c.h.b16 %v1068
      %v1126 = vunpack.c.l.b16 %v1069
      %v1127 = vunpack.c.h.b16 %v1069
      %v1128 = vunpack.c.l.b16 %v1070
      %v1129 = vunpack.c.h.b16 %v1070
      %v1130 = vunpack.c.l.b16 %v1071
      %v1131 = vunpack.c.h.b16 %v1071
      %v1132 = vpack.c.b16 %v1100, %v1096
      %v1133 = vpack.c.b16 %v1101, %v1097
      %v1134 = vpack.c.b16 %v1102, %v1098
      %v1135 = vpack.c.b16 %v1103, %v1099
      %v1136 = vpack.c.b16 %v1108, %v1104
      %v1137 = vpack.c.b16 %v1109, %v1105
      %v1138 = vpack.c.b16 %v1110, %v1106
      %v1139 = vpack.c.b16 %v1111, %v1107
      %v1140 = vpack.c.b16 %v1116, %v1112
      %v1141 = vpack.c.b16 %v1117, %v1113
      %v1142 = vpack.c.b16 %v1118, %v1114
      %v1143 = vpack.c.b16 %v1119, %v1115
      %v1144 = vpack.c.b16 %v1124, %v1120
      %v1145 = vpack.c.b16 %v1125, %v1121
      %v1146 = vpack.c.b16 %v1126, %v1122
      %v1147 = vpack.c.b16 %v1127, %v1123
      %v1148 = vpack.c.b16 %v1128, %v1128
      %v1149 = vpack.c.b16 %v1129, %v1129
      %v1150 = vpack.c.b16 %v1130, %v1130
      %v1151 = vpack.c.b16 %v1131, %v1131
      %v1169 = vsel %vm739, %v1053, 0
      %v1172 = vsel %vm743, %v1148, 0
      %v1175 = vsel %vm743, %v1149, 0
      %v1178 = vsel %vm743, %v1150, 0
      %v1181 = vsel %vm743, %v1151, 0
      %1183 = vmatprep.subr.bf16.mxu0 0
      %1184 = vmatpush1.bf16.msra.mxu0 0
      %1185 = vmatprep.subr.bf16.mxu0 0
      %1186 = vmatpush1.bf16.msra.mxu0 0
      %1187 = vmatprep.subr.bf16.mxu0 0
      %1188 = vmatpush1.bf16.msra.mxu0 0
      %1189 = vmatprep.subr.bf16.mxu0 %v1175
      %1190 = vmatpush1.bf16.msra.mxu0 %v1172
      %1191 = vmatprep.subr.bf16.mxu0 %v1145
      %1192 = vmatpush1.bf16.msra.mxu0 %v1144
      %1193 = vmatprep.subr.bf16.mxu0 %v1141
      %1194 = vmatpush1.bf16.msra.mxu0 %v1140
      %1195 = vmatprep.subr.bf16.mxu0 %v1137
      %1196 = vmatpush1.bf16.msra.mxu0 %v1136
      %1197 = vmatprep.subr.bf16.mxu0 %v1133
      %1198 = vmatpush1.bf16.msra.mxu0 %v1132
      %1199 = vmatprep.subr.bf16.mxu0 0
      %1200 = vmatpush2.bf16.msra.mxu0 0
      %1201 = vmatprep.subr.bf16.mxu0 0
      %1202 = vmatpush2.bf16.msra.mxu0 0
      %1203 = vmatprep.subr.bf16.mxu0 0
      %1204 = vmatpush2.bf16.msra.mxu0 0
      %1205 = vmatprep.subr.bf16.mxu0 0
      %1206 = vmatpush2.bf16.msra.mxu0 0
      %1207 = vmatprep.subr.bf16.mxu0 0
      %1208 = vmatpush2.bf16.msra.mxu0 0
      %1209 = vmatprep.subr.bf16.mxu0 0
      %1210 = vmatpush2.bf16.msra.mxu0 0
      %1211 = vmatprep.subr.bf16.mxu0 0
      %1212 = vmatpush2.bf16.msra.mxu0 0
      %1213 = vmatprep.subr.bf16.mxu0 0
      %1214 = vmatpush2.bf16.msra.mxu0 0
      %1215 = vmatprep.mubr.bf16.mxu0 0
      %1216 = vmatmul.mubr.bf16.gmra.mxu0 %v1169
      %v1217 = vpop.f32.mrf.mxu0
      %v1218 = vadd.f32 %v1076, %v1217
      %v1219 = vpop.f32.mrf.mxu0
      %v1220 = vadd.f32 %v1076, %v1219
      %v1221 = vpop.f32.mrf.mxu0
      %v1222 = vpop.f32.mrf.mxu0
      %1223 = vdwg.mxu0
      %1224 = vmatprep.subr.bf16.mxu0 0
      %1225 = vmatpush1.bf16.msra.mxu0 0
      %1226 = vmatprep.subr.bf16.mxu0 0
      %1227 = vmatpush1.bf16.msra.mxu0 0
      %1228 = vmatprep.subr.bf16.mxu0 0
      %1229 = vmatpush1.bf16.msra.mxu0 0
      %1230 = vmatprep.subr.bf16.mxu0 %v1181
      %1231 = vmatpush1.bf16.msra.mxu0 %v1178
      %1232 = vmatprep.subr.bf16.mxu0 %v1147
      %1233 = vmatpush1.bf16.msra.mxu0 %v1146
      %1234 = vmatprep.subr.bf16.mxu0 %v1143
      %1235 = vmatpush1.bf16.msra.mxu0 %v1142
      %1236 = vmatprep.subr.bf16.mxu0 %v1139
      %1237 = vmatpush1.bf16.msra.mxu0 %v1138
      %1238 = vmatprep.subr.bf16.mxu0 %v1135
      %1239 = vmatpush1.bf16.msra.mxu0 %v1134
      %1240 = vmatprep.subr.bf16.mxu0 0
      %1241 = vmatpush2.bf16.msra.mxu0 0
      %1242 = vmatprep.subr.bf16.mxu0 0
      %1243 = vmatpush2.bf16.msra.mxu0 0
      %1244 = vmatprep.subr.bf16.mxu0 0
      %1245 = vmatpush2.bf16.msra.mxu0 0
      %1246 = vmatprep.subr.bf16.mxu0 0
      %1247 = vmatpush2.bf16.msra.mxu0 0
      %1248 = vmatprep.subr.bf16.mxu0 0
      %1249 = vmatpush2.bf16.msra.mxu0 0
      %1250 = vmatprep.subr.bf16.mxu0 0
      %1251 = vmatpush2.bf16.msra.mxu0 0
      %1252 = vmatprep.subr.bf16.mxu0 0
      %1253 = vmatpush2.bf16.msra.mxu0 0
      %1254 = vmatprep.subr.bf16.mxu0 0
      %1255 = vmatpush2.bf16.msra.mxu0 0
      %1256 = vmatprep.mubr.bf16.mxu0 0
      %1257 = vmatmul.mubr.bf16.gmra.mxu0 %v1169
      %v1258 = vpop.f32.mrf.mxu0
      %v1259 = vadd.f32 %v1076, %v1258
      %v1260 = vpop.f32.mrf.mxu0
      %v1261 = vadd.f32 %v1076, %v1260
      %v1262 = vpop.f32.mrf.mxu0
      %v1263 = vpop.f32.mrf.mxu0
      %1264 = vdwg.mxu0
      %v1265 = vpack.c.bf16 %v1218, %v1218
      %v1266 = vpack.c.bf16 %v1220, %v1220
      %v1267 = vpack.c.bf16 %v1259, %v1259
      %v1268 = vpack.c.bf16 %v1261, %v1261
      %v1273 = vunpack.c.l.b16 %v1265
      %v1274 = vunpack.c.l.b16 %v1266
      %v1275 = vunpack.c.l.b16 %v1267
      %v1276 = vunpack.c.l.b16 %v1268
      %v1277 = vpack.c.b16 %v1274, %v1273
      %v1278 = vpack.c.b16 %v1276, %v1275
      %1281 = vst [vmem:[#allocation4] sm:$0xff] %v1277
      %1282 = vst [vmem:[#allocation4 + $0x8] sm:$0xff] %v1278
      %v1283 = vmax.f32 %v791, 0.0
      %v1284 = vmax.f32 %v793, 0.0
      %v1285 = vmax.f32 %v832, 0.0
      %v1286 = vmax.f32 %v834, 0.0
      %v1287 = vadd.f32 %v361, %v1283
      %v1288 = vadd.f32 %v362, %v1284
      %v1289 = vadd.f32 %v363, %v1285
      %v1290 = vadd.f32 %v364, %v1286
      %v1292 = vlaneseq
      %v1293 = vshrl.u32 %v1292, 7
      %v1294 = vsub.s32 0, %v1293
      %v1295 = vrot.slane %v365, %v1294
      %v1296 = vlaneseq
      %v1297 = vshrl.u32 %v1296, 7
      %v1298 = vsub.s32 1, %v1297
      %v1299 = vrot.slane %v365, %v1298
      %v1300 = vlaneseq
      %v1301 = vshrl.u32 %v1300, 7
      %v1302 = vsub.s32 2, %v1301
      %v1303 = vrot.slane %v365, %v1302
      %v1304 = vlaneseq
      %v1305 = vshrl.u32 %v1304, 7
      %v1306 = vsub.s32 3, %v1305
      %v1307 = vrot.slane %v365, %v1306
      %v1312 = vmul.f32 %v791, %v1295
      %v1313 = vmul.f32 %v793, %v1299
      %v1314 = vmul.f32 %v832, %v1303
      %v1315 = vmul.f32 %v834, %v1307
      %v1316 = vpack.c.bf16 %v1312, %v1312
      %v1317 = vpack.c.bf16 %v1313, %v1313
      %v1318 = vpack.c.bf16 %v1314, %v1314
      %v1319 = vpack.c.bf16 %v1315, %v1315
      %v1324 = vunpack.c.l.b16 %v1316
      %v1325 = vunpack.c.l.b16 %v1317
      %v1326 = vunpack.c.l.b16 %v1318
      %v1327 = vunpack.c.l.b16 %v1319
      %v1328 = vpack.c.b16 %v1325, %v1324
      %v1329 = vpack.c.b16 %v1327, %v1326
      %1330 = vrot.lane.b32.xlu0 %v1328, 9
      %v1331 = vpop.permute.xlu0 %1330
      %1332 = vrot.lane.b32.xlu0 %v1329, 9
      %v1333 = vpop.permute.xlu0 %1332
      %v1334 = vrot.slane %v1331, 4
      %v1335 = vrot.slane %v1333, 4
      %v1336 = vsel %vm394, %v1334, %v1331
      %v1337 = vsel %vm396, %v1334, %v1335
      %v1338 = vsel %vm394, %v1337, %v1333
      %1342 = vst.msk [vmem:[#allocation2 + $0x8] sm:$0xff] %vm403, %v1336
      %1343 = vst [vmem:[#allocation2 + $0x10] sm:$0xff] %v1338
      %1344 = vst.msk [vmem:[#allocation2 + $0x18] sm:$0xf] %vm406, %v1335
      %v1345 = vld [vmem:[#allocation2 + $0x4] sm:$0xff]
      %v1346 = vld [vmem:[#allocation2 + $0xc] sm:$0xff]
      %v1347 = vld [vmem:[#allocation2 + $0x14] sm:$0xf]
      %1351 = vrot.lane.b32.xlu0 %v1345, 72
      %v1352 = vpop.permute.xlu0 %1351
      %1353 = vrot.lane.b32.xlu0 %v1346, 72
      %v1354 = vpop.permute.xlu0 %1353
      %1355 = vrot.lane.b32.xlu0 %v1347, 72
      %v1356 = vpop.permute.xlu0 %1355
      %v1357 = vrot.slane %v1352, 4
      %v1358 = vrot.slane %v1354, 4
      %v1359 = vrot.slane %v1356, 4
      %v1360 = vsel %vm396, %v1357, %v1358
      %v1361 = vsel %vm854, %v1352, %v1360
      %v1362 = vsel %vm396, %v1358, %v1359
      %v1363 = vsel %vm854, %v1354, %v1362
      %1366 = vst [vmem:[#allocation3] sm:$0xff] %v1361
      %1367 = vst [vmem:[#allocation3 + $0x8] sm:$0xff] %v1363
      %v1368 = vld [vmem:[#allocation2 + $0x4] sm:$0xff]
      %v1369 = vld [vmem:[#allocation2 + $0xc] sm:$0xff]
      %v1370 = vld [vmem:[#allocation2 + $0x14] sm:$0xf]
      %1374 = vrot.lane.b32.xlu0 %v1368, 69
      %v1375 = vpop.permute.xlu0 %1374
      %1376 = vrot.lane.b32.xlu0 %v1369, 69
      %v1377 = vpop.permute.xlu0 %1376
      %1378 = vrot.lane.b32.xlu0 %v1370, 69
      %v1379 = vpop.permute.xlu0 %1378
      %v1380 = vrot.slane %v1375, 4
      %v1381 = vrot.slane %v1377, 4
      %v1382 = vrot.slane %v1379, 4
      %v1383 = vsel %vm396, %v1380, %v1381
      %v1384 = vsel %vm878, %v1375, %v1383
      %v1385 = vsel %vm396, %v1381, %v1382
      %v1386 = vsel %vm878, %v1377, %v1385
      %1389 = vst [vmem:[#allocation3 + $0x10] sm:$0xff] %v1384
      %1390 = vst [vmem:[#allocation3 + $0x18] sm:$0xff] %v1386
      %v1391 = vld [vmem:[#allocation2 + $0x4] sm:$0xff]
      %v1392 = vld [vmem:[#allocation2 + $0xc] sm:$0xff]
      %v1393 = vld [vmem:[#allocation2 + $0x14] sm:$0xf]
      %1397 = vrot.lane.b32.xlu0 %v1391, 66
      %v1398 = vpop.permute.xlu0 %1397
      %1399 = vrot.lane.b32.xlu0 %v1392, 66
      %v1400 = vpop.permute.xlu0 %1399
      %1401 = vrot.lane.b32.xlu0 %v1393, 66
      %v1402 = vpop.permute.xlu0 %1401
      %v1403 = vrot.slane %v1398, 4
      %v1404 = vrot.slane %v1400, 4
      %v1405 = vrot.slane %v1402, 4
      %v1406 = vsel %vm396, %v1403, %v1404
      %v1407 = vsel %vm902, %v1398, %v1406
      %v1408 = vsel %vm396, %v1404, %v1405
      %v1409 = vsel %vm902, %v1400, %v1408
      %1412 = vst [vmem:[#allocation3 + $0x20] sm:$0xff] %v1407
      %1413 = vst [vmem:[#allocation3 + $0x28] sm:$0xff] %v1409
      %v1414 = vld [vmem:[#allocation2 + $0x8] sm:$0xff]
      %v1415 = vld [vmem:[#allocation2 + $0x10] sm:$0xff]
      %v1416 = vld [vmem:[#allocation2 + $0x18] sm:$0xf]
      %1420 = vrot.lane.b32.xlu0 %v1414, 122
      %v1421 = vpop.permute.xlu0 %1420
      %1422 = vrot.lane.b32.xlu0 %v1415, 122
      %v1423 = vpop.permute.xlu0 %1422
      %1424 = vrot.lane.b32.xlu0 %v1416, 122
      %v1425 = vpop.permute.xlu0 %1424
      %v1426 = vrot.slane %v1421, 4
      %v1427 = vrot.slane %v1423, 4
      %v1428 = vrot.slane %v1425, 4
      %v1429 = vsel %vm396, %v1426, %v1427
      %v1430 = vsel %vm926, %v1421, %v1429
      %v1431 = vsel %vm396, %v1427, %v1428
      %v1432 = vsel %vm926, %v1423, %v1431
      %1435 = vst [vmem:[#allocation3 + $0x30] sm:$0xff] %v1430
      %1436 = vst [vmem:[#allocation3 + $0x38] sm:$0xff] %v1432
      %v1437 = vld [vmem:[#allocation2 + $0x8] sm:$0xff]
      %v1438 = vld [vmem:[#allocation2 + $0x10] sm:$0xff]
      %v1439 = vld [vmem:[#allocation2 + $0x18] sm:$0xf]
      %1443 = vrot.lane.b32.xlu0 %v1437, 119
      %v1444 = vpop.permute.xlu0 %1443
      %1445 = vrot.lane.b32.xlu0 %v1438, 119
      %v1446 = vpop.permute.xlu0 %1445
      %1447 = vrot.lane.b32.xlu0 %v1439, 119
      %v1448 = vpop.permute.xlu0 %1447
      %v1449 = vrot.slane %v1444, 4
      %v1450 = vrot.slane %v1446, 4
      %v1451 = vrot.slane %v1448, 4
      %v1452 = vsel %vm396, %v1449, %v1450
      %v1453 = vsel %vm520, %v1444, %v1452
      %v1454 = vsel %vm396, %v1450, %v1451
      %v1455 = vsel %vm520, %v1446, %v1454
      %1458 = vst [vmem:[#allocation3 + $0x40] sm:$0xff] %v1453
      %1459 = vst [vmem:[#allocation3 + $0x48] sm:$0xff] %v1455
      %v1460 = vld [vmem:[#allocation2 + $0x8] sm:$0xff]
      %v1461 = vld [vmem:[#allocation2 + $0x10] sm:$0xff]
      %v1462 = vld [vmem:[#allocation2 + $0x18] sm:$0xf]
      %1466 = vrot.lane.b32.xlu0 %v1460, 116
      %v1467 = vpop.permute.xlu0 %1466
      %1468 = vrot.lane.b32.xlu0 %v1461, 116
      %v1469 = vpop.permute.xlu0 %1468
      %1470 = vrot.lane.b32.xlu0 %v1462, 116
      %v1471 = vpop.permute.xlu0 %1470
      %v1472 = vrot.slane %v1467, 4
      %v1473 = vrot.slane %v1469, 4
      %v1474 = vrot.slane %v1471, 4
      %v1475 = vsel %vm396, %v1472, %v1473
      %v1476 = vsel %vm973, %v1467, %v1475
      %v1477 = vsel %vm396, %v1473, %v1474
      %v1478 = vsel %vm973, %v1469, %v1477
      %1481 = vst [vmem:[#allocation3 + $0x50] sm:$0xff] %v1476
      %1482 = vst [vmem:[#allocation3 + $0x58] sm:$0xff] %v1478
      %v1483 = vld [vmem:[#allocation2 + $0x8] sm:$0xff]
      %v1484 = vld [vmem:[#allocation2 + $0x10] sm:$0xff]
      %v1485 = vld [vmem:[#allocation2 + $0x18] sm:$0xf]
      %1489 = vrot.lane.b32.xlu0 %v1483, 44
      %v1490 = vpop.permute.xlu0 %1489
      %1491 = vrot.lane.b32.xlu0 %v1484, 44
      %v1492 = vpop.permute.xlu0 %1491
      %1493 = vrot.lane.b32.xlu0 %v1485, 44
      %v1494 = vpop.permute.xlu0 %1493
      %v1495 = vrot.slane %v1490, 4
      %v1496 = vrot.slane %v1492, 4
      %v1497 = vrot.slane %v1494, 4
      %v1498 = vsel %vm396, %v1495, %v1496
      %v1499 = vsel %vm997, %v1490, %v1498
      %v1500 = vsel %vm396, %v1496, %v1497
      %v1501 = vsel %vm997, %v1492, %v1500
      %1504 = vst [vmem:[#allocation3 + $0x60] sm:$0xff] %v1499
      %1505 = vst [vmem:[#allocation3 + $0x68] sm:$0xff] %v1501
      %v1506 = vld [vmem:[#allocation2 + $0x8] sm:$0xff]
      %v1507 = vld [vmem:[#allocation2 + $0x10] sm:$0xff]
      %v1508 = vld [vmem:[#allocation2 + $0x18] sm:$0xf]
      %1512 = vrot.lane.b32.xlu0 %v1506, 41
      %v1513 = vpop.permute.xlu0 %1512
      %1514 = vrot.lane.b32.xlu0 %v1507, 41
      %v1515 = vpop.permute.xlu0 %1514
      %1516 = vrot.lane.b32.xlu0 %v1508, 41
      %v1517 = vpop.permute.xlu0 %1516
      %v1518 = vrot.slane %v1513, 4
      %v1519 = vrot.slane %v1515, 4
      %v1520 = vrot.slane %v1517, 4
      %v1521 = vsel %vm396, %v1518, %v1519
      %v1522 = vsel %vm1021, %v1513, %v1521
      %v1523 = vsel %vm396, %v1519, %v1520
      %v1524 = vsel %vm1021, %v1515, %v1523
      %1527 = vst [vmem:[#allocation3 + $0x70] sm:$0xff] %v1522
      %1528 = vst [vmem:[#allocation3 + $0x78] sm:$0xff] %v1524
      %v1529 = vld [vmem:[#allocation2 + $0x8] sm:$0xff]
      %v1530 = vld [vmem:[#allocation2 + $0x10] sm:$0xff]
      %v1531 = vld [vmem:[#allocation2 + $0x18] sm:$0xf]
      %1535 = vrot.lane.b32.xlu0 %v1529, 38
      %v1536 = vpop.permute.xlu0 %1535
      %1537 = vrot.lane.b32.xlu0 %v1530, 38
      %v1538 = vpop.permute.xlu0 %1537
      %1539 = vrot.lane.b32.xlu0 %v1531, 38
      %v1540 = vpop.permute.xlu0 %1539
      %v1541 = vrot.slane %v1536, 4
      %v1542 = vrot.slane %v1538, 4
      %v1543 = vrot.slane %v1540, 4
      %v1544 = vsel %vm396, %v1541, %v1542
      %v1545 = vsel %vm1045, %v1536, %v1544
      %v1546 = vsel %vm396, %v1542, %v1543
      %v1547 = vsel %vm1045, %v1538, %v1546
      %1550 = vst [vmem:[#allocation3 + $0x80] sm:$0xff] %v1545
      %1551 = vst [vmem:[#allocation3 + $0x88] sm:$0xff] %v1547
      %v1552 = vld [vmem:[%s3] sm:$0xf]
      %v1553 = vld [vmem:[#allocation3] sm:$0xff]
      %v1554 = vld [vmem:[#allocation3 + $0x8] sm:$0xff]
      %v1555 = vld [vmem:[#allocation3 + $0x10] sm:$0xff]
      %v1556 = vld [vmem:[#allocation3 + $0x18] sm:$0xff]
      %v1557 = vld [vmem:[#allocation3 + $0x20] sm:$0xff]
      %v1558 = vld [vmem:[#allocation3 + $0x28] sm:$0xff]
      %v1559 = vld [vmem:[#allocation3 + $0x30] sm:$0xff]
      %v1560 = vld [vmem:[#allocation3 + $0x38] sm:$0xff]
      %v1561 = vld [vmem:[#allocation3 + $0x40] sm:$0xff]
      %v1562 = vld [vmem:[#allocation3 + $0x48] sm:$0xff]
      %v1563 = vld [vmem:[#allocation3 + $0x50] sm:$0xff]
      %v1564 = vld [vmem:[#allocation3 + $0x58] sm:$0xff]
      %v1565 = vld [vmem:[#allocation3 + $0x60] sm:$0xff]
      %v1566 = vld [vmem:[#allocation3 + $0x68] sm:$0xff]
      %v1567 = vld [vmem:[#allocation3 + $0x70] sm:$0xff]
      %v1568 = vld [vmem:[#allocation3 + $0x78] sm:$0xff]
      %v1569 = vld [vmem:[#allocation3 + $0x80] sm:$0xff]
      %v1570 = vld [vmem:[#allocation3 + $0x88] sm:$0xff]
      %v1571 = vld [vmem:[%s7] sm:$0xff]
      %1573 = vset.pattern.permute.xlu0 0
      %1574 = vperm.xlu0 %1573, %v1571
      %v1575 = vpop.permute.xlu0 %1574
      %v1595 = vunpack.c.l.b16 %v1553
      %v1596 = vunpack.c.h.b16 %v1553
      %v1597 = vunpack.c.l.b16 %v1554
      %v1598 = vunpack.c.h.b16 %v1554
      %v1599 = vunpack.c.l.b16 %v1555
      %v1600 = vunpack.c.h.b16 %v1555
      %v1601 = vunpack.c.l.b16 %v1556
      %v1602 = vunpack.c.h.b16 %v1556
      %v1603 = vunpack.c.l.b16 %v1557
      %v1604 = vunpack.c.h.b16 %v1557
      %v1605 = vunpack.c.l.b16 %v1558
      %v1606 = vunpack.c.h.b16 %v1558
      %v1607 = vunpack.c.l.b16 %v1559
      %v1608 = vunpack.c.h.b16 %v1559
      %v1609 = vunpack.c.l.b16 %v1560
      %v1610 = vunpack.c.h.b16 %v1560
      %v1611 = vunpack.c.l.b16 %v1561
      %v1612 = vunpack.c.h.b16 %v1561
      %v1613 = vunpack.c.l.b16 %v1562
      %v1614 = vunpack.c.h.b16 %v1562
      %v1615 = vunpack.c.l.b16 %v1563
      %v1616 = vunpack.c.h.b16 %v1563
      %v1617 = vunpack.c.l.b16 %v1564
      %v1618 = vunpack.c.h.b16 %v1564
      %v1619 = vunpack.c.l.b16 %v1565
      %v1620 = vunpack.c.h.b16 %v1565
      %v1621 = vunpack.c.l.b16 %v1566
      %v1622 = vunpack.c.h.b16 %v1566
      %v1623 = vunpack.c.l.b16 %v1567
      %v1624 = vunpack.c.h.b16 %v1567
      %v1625 = vunpack.c.l.b16 %v1568
      %v1626 = vunpack.c.h.b16 %v1568
      %v1627 = vunpack.c.l.b16 %v1569
      %v1628 = vunpack.c.h.b16 %v1569
      %v1629 = vunpack.c.l.b16 %v1570
      %v1630 = vunpack.c.h.b16 %v1570
      %v1631 = vpack.c.b16 %v1599, %v1595
      %v1632 = vpack.c.b16 %v1600, %v1596
      %v1633 = vpack.c.b16 %v1601, %v1597
      %v1634 = vpack.c.b16 %v1602, %v1598
      %v1635 = vpack.c.b16 %v1607, %v1603
      %v1636 = vpack.c.b16 %v1608, %v1604
      %v1637 = vpack.c.b16 %v1609, %v1605
      %v1638 = vpack.c.b16 %v1610, %v1606
      %v1639 = vpack.c.b16 %v1615, %v1611
      %v1640 = vpack.c.b16 %v1616, %v1612
      %v1641 = vpack.c.b16 %v1617, %v1613
      %v1642 = vpack.c.b16 %v1618, %v1614
      %v1643 = vpack.c.b16 %v1623, %v1619
      %v1644 = vpack.c.b16 %v1624, %v1620
      %v1645 = vpack.c.b16 %v1625, %v1621
      %v1646 = vpack.c.b16 %v1626, %v1622
      %v1647 = vpack.c.b16 %v1627, %v1627
      %v1648 = vpack.c.b16 %v1628, %v1628
      %v1649 = vpack.c.b16 %v1629, %v1629
      %v1650 = vpack.c.b16 %v1630, %v1630
      %v1668 = vsel %vm739, %v1552, 0
      %v1671 = vsel %vm743, %v1647, 0
      %v1674 = vsel %vm743, %v1648, 0
      %v1677 = vsel %vm743, %v1649, 0
      %v1680 = vsel %vm743, %v1650, 0
      %1682 = vmatprep.subr.bf16.mxu0 0
      %1683 = vmatpush1.bf16.msra.mxu0 0
      %1684 = vmatprep.subr.bf16.mxu0 0
      %1685 = vmatpush1.bf16.msra.mxu0 0
      %1686 = vmatprep.subr.bf16.mxu0 0
      %1687 = vmatpush1.bf16.msra.mxu0 0
      %1688 = vmatprep.subr.bf16.mxu0 %v1674
      %1689 = vmatpush1.bf16.msra.mxu0 %v1671
      %1690 = vmatprep.subr.bf16.mxu0 %v1644
      %1691 = vmatpush1.bf16.msra.mxu0 %v1643
      %1692 = vmatprep.subr.bf16.mxu0 %v1640
      %1693 = vmatpush1.bf16.msra.mxu0 %v1639
      %1694 = vmatprep.subr.bf16.mxu0 %v1636
      %1695 = vmatpush1.bf16.msra.mxu0 %v1635
      %1696 = vmatprep.subr.bf16.mxu0 %v1632
      %1697 = vmatpush1.bf16.msra.mxu0 %v1631
      %1698 = vmatprep.subr.bf16.mxu0 0
      %1699 = vmatpush2.bf16.msra.mxu0 0
      %1700 = vmatprep.subr.bf16.mxu0 0
      %1701 = vmatpush2.bf16.msra.mxu0 0
      %1702 = vmatprep.subr.bf16.mxu0 0
      %1703 = vmatpush2.bf16.msra.mxu0 0
      %1704 = vmatprep.subr.bf16.mxu0 0
      %1705 = vmatpush2.bf16.msra.mxu0 0
      %1706 = vmatprep.subr.bf16.mxu0 0
      %1707 = vmatpush2.bf16.msra.mxu0 0
      %1708 = vmatprep.subr.bf16.mxu0 0
      %1709 = vmatpush2.bf16.msra.mxu0 0
      %1710 = vmatprep.subr.bf16.mxu0 0
      %1711 = vmatpush2.bf16.msra.mxu0 0
      %1712 = vmatprep.subr.bf16.mxu0 0
      %1713 = vmatpush2.bf16.msra.mxu0 0
      %1714 = vmatprep.mubr.bf16.mxu0 0
      %1715 = vmatmul.mubr.bf16.gmra.mxu0 %v1668
      %v1716 = vpop.f32.mrf.mxu0
      %v1717 = vadd.f32 %v1575, %v1716
      %v1718 = vpop.f32.mrf.mxu0
      %v1719 = vadd.f32 %v1575, %v1718
      %v1720 = vpop.f32.mrf.mxu0
      %v1721 = vpop.f32.mrf.mxu0
      %1722 = vdwg.mxu0
      %1723 = vmatprep.subr.bf16.mxu0 0
      %1724 = vmatpush1.bf16.msra.mxu0 0
      %1725 = vmatprep.subr.bf16.mxu0 0
      %1726 = vmatpush1.bf16.msra.mxu0 0
      %1727 = vmatprep.subr.bf16.mxu0 0
      %1728 = vmatpush1.bf16.msra.mxu0 0
      %1729 = vmatprep.subr.bf16.mxu0 %v1680
      %1730 = vmatpush1.bf16.msra.mxu0 %v1677
      %1731 = vmatprep.subr.bf16.mxu0 %v1646
      %1732 = vmatpush1.bf16.msra.mxu0 %v1645
      %1733 = vmatprep.subr.bf16.mxu0 %v1642
      %1734 = vmatpush1.bf16.msra.mxu0 %v1641
      %1735 = vmatprep.subr.bf16.mxu0 %v1638
      %1736 = vmatpush1.bf16.msra.mxu0 %v1637
      %1737 = vmatprep.subr.bf16.mxu0 %v1634
      %1738 = vmatpush1.bf16.msra.mxu0 %v1633
      %1739 = vmatprep.subr.bf16.mxu0 0
      %1740 = vmatpush2.bf16.msra.mxu0 0
      %1741 = vmatprep.subr.bf16.mxu0 0
      %1742 = vmatpush2.bf16.msra.mxu0 0
      %1743 = vmatprep.subr.bf16.mxu0 0
      %1744 = vmatpush2.bf16.msra.mxu0 0
      %1745 = vmatprep.subr.bf16.mxu0 0
      %1746 = vmatpush2.bf16.msra.mxu0 0
      %1747 = vmatprep.subr.bf16.mxu0 0
      %1748 = vmatpush2.bf16.msra.mxu0 0
      %1749 = vmatprep.subr.bf16.mxu0 0
      %1750 = vmatpush2.bf16.msra.mxu0 0
      %1751 = vmatprep.subr.bf16.mxu0 0
      %1752 = vmatpush2.bf16.msra.mxu0 0
      %1753 = vmatprep.subr.bf16.mxu0 0
      %1754 = vmatpush2.bf16.msra.mxu0 0
      %1755 = vmatprep.mubr.bf16.mxu0 0
      %1756 = vmatmul.mubr.bf16.gmra.mxu0 %v1668
      %v1757 = vpop.f32.mrf.mxu0
      %v1758 = vadd.f32 %v1575, %v1757
      %v1759 = vpop.f32.mrf.mxu0
      %v1760 = vadd.f32 %v1575, %v1759
      %v1761 = vpop.f32.mrf.mxu0
      %v1762 = vpop.f32.mrf.mxu0
      %1763 = vdwg.mxu0
      %v1764 = vpack.c.bf16 %v1717, %v1717
      %v1765 = vpack.c.bf16 %v1719, %v1719
      %v1766 = vpack.c.bf16 %v1758, %v1758
      %v1767 = vpack.c.bf16 %v1760, %v1760
      %v1772 = vunpack.c.l.b16 %v1764
      %v1773 = vunpack.c.l.b16 %v1765
      %v1774 = vunpack.c.l.b16 %v1766
      %v1775 = vunpack.c.l.b16 %v1767
      %v1776 = vpack.c.b16 %v1773, %v1772
      %v1777 = vpack.c.b16 %v1775, %v1774
      %1780 = vst [vmem:[#allocation4 + $0x10] sm:$0xff] %v1776
      %1781 = vst [vmem:[#allocation4 + $0x18] sm:$0xff] %v1777
      %v1782 = vmul.f32 %v1717, %v1295
      %v1783 = vmul.f32 %v1719, %v1299
      %v1784 = vmul.f32 %v1758, %v1303
      %v1785 = vmul.f32 %v1760, %v1307
      %v1786 = vpack.c.bf16 %v1782, %v1782
      %v1787 = vpack.c.bf16 %v1783, %v1783
      %v1788 = vpack.c.bf16 %v1784, %v1784
      %v1789 = vpack.c.bf16 %v1785, %v1785
      %v1794 = vunpack.c.l.b16 %v1786
      %v1795 = vunpack.c.l.b16 %v1787
      %v1796 = vunpack.c.l.b16 %v1788
      %v1797 = vunpack.c.l.b16 %v1789
      %v1798 = vpack.c.b16 %v1795, %v1794
      %v1799 = vpack.c.b16 %v1797, %v1796
      %1800 = vrot.lane.b32.xlu0 %v1798, 9
      %v1801 = vpop.permute.xlu0 %1800
      %1802 = vrot.lane.b32.xlu0 %v1799, 9
      %v1803 = vpop.permute.xlu0 %1802
      %v1804 = vrot.slane %v1801, 4
      %v1805 = vrot.slane %v1803, 4
      %v1806 = vsel %vm394, %v1804, %v1801
      %v1807 = vsel %vm396, %v1804, %v1805
      %v1808 = vsel %vm394, %v1807, %v1803
      %1812 = vst.msk [vmem:[#allocation2 + $0x8] sm:$0xff] %vm403, %v1806
      %1813 = vst [vmem:[#allocation2 + $0x10] sm:$0xff] %v1808
      %1814 = vst.msk [vmem:[#allocation2 + $0x18] sm:$0xf] %vm406, %v1805
      %v1815 = vld [vmem:[#allocation2 + $0x4] sm:$0xff]
      %v1816 = vld [vmem:[#allocation2 + $0xc] sm:$0xff]
      %v1817 = vld [vmem:[#allocation2 + $0x14] sm:$0xf]
      %1821 = vrot.lane.b32.xlu0 %v1815, 126
      %v1822 = vpop.permute.xlu0 %1821
      %1823 = vrot.lane.b32.xlu0 %v1816, 126
      %v1824 = vpop.permute.xlu0 %1823
      %1825 = vrot.lane.b32.xlu0 %v1817, 126
      %v1826 = vpop.permute.xlu0 %1825
      %v1827 = vrot.slane %v1822, 4
      %v1828 = vrot.slane %v1824, 4
      %v1829 = vrot.slane %v1826, 4
      %v1830 = vsel %vm396, %v1827, %v1828
      %vm1831 = vcmask 1031168
      %v1832 = vsel %vm1831, %v1822, %v1830
      %v1833 = vsel %vm396, %v1828, %v1829
      %v1834 = vsel %vm1831, %v1824, %v1833
      %1837 = vst [vmem:[#allocation3] sm:$0xff] %v1832
      %1838 = vst [vmem:[#allocation3 + $0x8] sm:$0xff] %v1834
      %v1839 = vld [vmem:[#allocation2 + $0x4] sm:$0xff]
      %v1840 = vld [vmem:[#allocation2 + $0xc] sm:$0xff]
      %v1841 = vld [vmem:[#allocation2 + $0x14] sm:$0xf]
      %1845 = vrot.lane.b32.xlu0 %v1839, 121
      %v1846 = vpop.permute.xlu0 %1845
      %1847 = vrot.lane.b32.xlu0 %v1840, 121
      %v1848 = vpop.permute.xlu0 %1847
      %1849 = vrot.lane.b32.xlu0 %v1841, 121
      %v1850 = vpop.permute.xlu0 %1849
      %v1851 = vrot.slane %v1846, 4
      %v1852 = vrot.slane %v1848, 4
      %v1853 = vrot.slane %v1850, 4
      %v1854 = vsel %vm396, %v1851, %v1852
      %vm1855 = vcmask 990208
      %v1856 = vsel %vm1855, %v1846, %v1854
      %v1857 = vsel %vm396, %v1852, %v1853
      %v1858 = vsel %vm1855, %v1848, %v1857
      %1861 = vst [vmem:[#allocation3 + $0x10] sm:$0xff] %v1856
      %1862 = vst [vmem:[#allocation3 + $0x18] sm:$0xff] %v1858
      %v1863 = vld [vmem:[#allocation2 + $0x4] sm:$0xff]
      %v1864 = vld [vmem:[#allocation2 + $0xc] sm:$0xff]
      %v1865 = vld [vmem:[#allocation2 + $0x14] sm:$0xf]
      %1869 = vrot.lane.b32.xlu0 %v1863, 116
      %v1870 = vpop.permute.xlu0 %1869
      %1871 = vrot.lane.b32.xlu0 %v1864, 116
      %v1872 = vpop.permute.xlu0 %1871
      %1873 = vrot.lane.b32.xlu0 %v1865, 116
      %v1874 = vpop.permute.xlu0 %1873
      %v1875 = vrot.slane %v1870, 4
      %v1876 = vrot.slane %v1872, 4
      %v1877 = vrot.slane %v1874, 4
      %v1878 = vsel %vm396, %v1875, %v1876
      %v1879 = vsel %vm973, %v1870, %v1878
      %v1880 = vsel %vm396, %v1876, %v1877
      %v1881 = vsel %vm973, %v1872, %v1880
      %1884 = vst [vmem:[#allocation3 + $0x20] sm:$0xff] %v1879
      %1885 = vst [vmem:[#allocation3 + $0x28] sm:$0xff] %v1881
      %v1886 = vld [vmem:[#allocation2 + $0x8] sm:$0xff]
      %v1887 = vld [vmem:[#allocation2 + $0x10] sm:$0xff]
      %v1888 = vld [vmem:[#allocation2 + $0x18] sm:$0xf]
      %1892 = vrot.lane.b32.xlu0 %v1886, 124
      %v1893 = vpop.permute.xlu0 %1892
      %1894 = vrot.lane.b32.xlu0 %v1887, 124
      %v1895 = vpop.permute.xlu0 %1894
      %1896 = vrot.lane.b32.xlu0 %v1888, 124
      %v1897 = vpop.permute.xlu0 %1896
      %v1898 = vrot.slane %v1893, 4
      %v1899 = vrot.slane %v1895, 4
      %v1900 = vrot.slane %v1897, 4
      %v1901 = vsel %vm396, %v1898, %v1899
      %vm1902 = vcmask 1014784
      %v1903 = vsel %vm1902, %v1893, %v1901
      %v1904 = vsel %vm396, %v1899, %v1900
      %v1905 = vsel %vm1902, %v1895, %v1904
      %1908 = vst [vmem:[#allocation3 + $0x30] sm:$0xff] %v1903
      %1909 = vst [vmem:[#allocation3 + $0x38] sm:$0xff] %v1905
      %v1910 = vld [vmem:[#allocation2 + $0x8] sm:$0xff]
      %v1911 = vld [vmem:[#allocation2 + $0x10] sm:$0xff]
      %v1912 = vld [vmem:[#allocation2 + $0x18] sm:$0xf]
      %1916 = vrot.lane.b32.xlu0 %v1910, 119
      %v1917 = vpop.permute.xlu0 %1916
      %1918 = vrot.lane.b32.xlu0 %v1911, 119
      %v1919 = vpop.permute.xlu0 %1918
      %1920 = vrot.lane.b32.xlu0 %v1912, 119
      %v1921 = vpop.permute.xlu0 %1920
      %v1922 = vrot.slane %v1917, 4
      %v1923 = vrot.slane %v1919, 4
      %v1924 = vrot.slane %v1921, 4
      %v1925 = vsel %vm396, %v1922, %v1923
      %v1926 = vsel %vm520, %v1917, %v1925
      %v1927 = vsel %vm396, %v1923, %v1924
      %v1928 = vsel %vm520, %v1919, %v1927
      %1931 = vst [vmem:[#allocation3 + $0x40] sm:$0xff] %v1926
      %1932 = vst [vmem:[#allocation3 + $0x48] sm:$0xff] %v1928
      %v1933 = vld [vmem:[#allocation2 + $0x8] sm:$0xff]
      %v1934 = vld [vmem:[#allocation2 + $0x10] sm:$0xff]
      %v1935 = vld [vmem:[#allocation2 + $0x18] sm:$0xf]
      %1939 = vrot.lane.b32.xlu0 %v1933, 114
      %v1940 = vpop.permute.xlu0 %1939
      %1941 = vrot.lane.b32.xlu0 %v1934, 114
      %v1942 = vpop.permute.xlu0 %1941
      %1943 = vrot.lane.b32.xlu0 %v1935, 114
      %v1944 = vpop.permute.xlu0 %1943
      %v1945 = vrot.slane %v1940, 4
      %v1946 = vrot.slane %v1942, 4
      %v1947 = vrot.slane %v1944, 4
      %v1948 = vsel %vm396, %v1945, %v1946
      %vm1949 = vcmask 932864
      %v1950 = vsel %vm1949, %v1940, %v1948
      %v1951 = vsel %vm396, %v1946, %v1947
      %v1952 = vsel %vm1949, %v1942, %v1951
      %1955 = vst [vmem:[#allocation3 + $0x50] sm:$0xff] %v1950
      %1956 = vst [vmem:[#allocation3 + $0x58] sm:$0xff] %v1952
      %v1957 = vld [vmem:[#allocation2 + $0xc] sm:$0xff]
      %v1958 = vld [vmem:[#allocation2 + $0x14] sm:$0xff]
      %v1959 = vld [vmem:[#allocation2 + $0x1c] sm:$0xf]
      %1963 = vrot.lane.b32.xlu0 %v1957, 122
      %v1964 = vpop.permute.xlu0 %1963
      %1965 = vrot.lane.b32.xlu0 %v1958, 122
      %v1966 = vpop.permute.xlu0 %1965
      %1967 = vrot.lane.b32.xlu0 %v1959, 122
      %v1968 = vpop.permute.xlu0 %1967
      %v1969 = vrot.slane %v1964, 4
      %v1970 = vrot.slane %v1966, 4
      %v1971 = vrot.slane %v1968, 4
      %v1972 = vsel %vm396, %v1969, %v1970
      %v1973 = vsel %vm926, %v1964, %v1972
      %v1974 = vsel %vm396, %v1970, %v1971
      %v1975 = vsel %vm926, %v1966, %v1974
      %1978 = vst [vmem:[#allocation3 + $0x60] sm:$0xff] %v1973
      %1979 = vst [vmem:[#allocation3 + $0x68] sm:$0xff] %v1975
      %v1980 = vld [vmem:[#allocation2 + $0xc] sm:$0xff]
      %v1981 = vld [vmem:[#allocation2 + $0x14] sm:$0xff]
      %v1982 = vld [vmem:[#allocation2 + $0x1c] sm:$0xf]
      %1986 = vrot.lane.b32.xlu0 %v1980, 117
      %v1987 = vpop.permute.xlu0 %1986
      %1988 = vrot.lane.b32.xlu0 %v1981, 117
      %v1989 = vpop.permute.xlu0 %1988
      %1990 = vrot.lane.b32.xlu0 %v1982, 117
      %v1991 = vpop.permute.xlu0 %1990
      %v1992 = vrot.slane %v1987, 4
      %v1993 = vrot.slane %v1989, 4
      %v1994 = vrot.slane %v1991, 4
      %v1995 = vsel %vm396, %v1992, %v1993
      %vm1996 = vcmask 957440
      %v1997 = vsel %vm1996, %v1987, %v1995
      %v1998 = vsel %vm396, %v1993, %v1994
      %v1999 = vsel %vm1996, %v1989, %v1998
      %2002 = vst [vmem:[#allocation3 + $0x70] sm:$0xff] %v1997
      %2003 = vst [vmem:[#allocation3 + $0x78] sm:$0xff] %v1999
      %v2004 = vld [vmem:[#allocation2 + $0xc] sm:$0xff]
      %v2005 = vld [vmem:[#allocation2 + $0x14] sm:$0xff]
      %v2006 = vld [vmem:[#allocation2 + $0x1c] sm:$0xf]
      %2010 = vrot.lane.b32.xlu0 %v2004, 112
      %v2011 = vpop.permute.xlu0 %2010
      %2012 = vrot.lane.b32.xlu0 %v2005, 112
      %v2013 = vpop.permute.xlu0 %2012
      %2014 = vrot.lane.b32.xlu0 %v2006, 112
      %v2015 = vpop.permute.xlu0 %2014
      %v2016 = vrot.slane %v2011, 4
      %v2017 = vrot.slane %v2013, 4
      %v2018 = vrot.slane %v2015, 4
      %v2019 = vsel %vm396, %v2016, %v2017
      %vm2020 = vcmask 916480
      %v2021 = vsel %vm2020, %v2011, %v2019
      %v2022 = vsel %vm396, %v2017, %v2018
      %v2023 = vsel %vm2020, %v2013, %v2022
      %2026 = vst [vmem:[#allocation3 + $0x80] sm:$0xff] %v2021
      %2027 = vst [vmem:[#allocation3 + $0x88] sm:$0xff] %v2023
      %v2028 = vld [vmem:[%s4] sm:$0xf]
      %v2029 = vld [vmem:[#allocation3] sm:$0xff]
      %v2030 = vld [vmem:[#allocation3 + $0x8] sm:$0xff]
      %v2031 = vld [vmem:[#allocation3 + $0x10] sm:$0xff]
      %v2032 = vld [vmem:[#allocation3 + $0x18] sm:$0xff]
      %v2033 = vld [vmem:[#allocation3 + $0x20] sm:$0xff]
      %v2034 = vld [vmem:[#allocation3 + $0x28] sm:$0xff]
      %v2035 = vld [vmem:[#allocation3 + $0x30] sm:$0xff]
      %v2036 = vld [vmem:[#allocation3 + $0x38] sm:$0xff]
      %v2037 = vld [vmem:[#allocation3 + $0x40] sm:$0xff]
      %v2038 = vld [vmem:[#allocation3 + $0x48] sm:$0xff]
      %v2039 = vld [vmem:[#allocation3 + $0x50] sm:$0xff]
      %v2040 = vld [vmem:[#allocation3 + $0x58] sm:$0xff]
      %v2041 = vld [vmem:[#allocation3 + $0x60] sm:$0xff]
      %v2042 = vld [vmem:[#allocation3 + $0x68] sm:$0xff]
      %v2043 = vld [vmem:[#allocation3 + $0x70] sm:$0xff]
      %v2044 = vld [vmem:[#allocation3 + $0x78] sm:$0xff]
      %v2045 = vld [vmem:[#allocation3 + $0x80] sm:$0xff]
      %v2046 = vld [vmem:[#allocation3 + $0x88] sm:$0xff]
      %v2047 = vld [vmem:[%s8] sm:$0xff]
      %2049 = vset.pattern.permute.xlu0 0
      %2050 = vperm.xlu0 %2049, %v2047
      %v2051 = vpop.permute.xlu0 %2050
      %v2071 = vunpack.c.l.b16 %v2029
      %v2072 = vunpack.c.h.b16 %v2029
      %v2073 = vunpack.c.l.b16 %v2030
      %v2074 = vunpack.c.h.b16 %v2030
      %v2075 = vunpack.c.l.b16 %v2031
      %v2076 = vunpack.c.h.b16 %v2031
      %v2077 = vunpack.c.l.b16 %v2032
      %v2078 = vunpack.c.h.b16 %v2032
      %v2079 = vunpack.c.l.b16 %v2033
      %v2080 = vunpack.c.h.b16 %v2033
      %v2081 = vunpack.c.l.b16 %v2034
      %v2082 = vunpack.c.h.b16 %v2034
      %v2083 = vunpack.c.l.b16 %v2035
      %v2084 = vunpack.c.h.b16 %v2035
      %v2085 = vunpack.c.l.b16 %v2036
      %v2086 = vunpack.c.h.b16 %v2036
      %v2087 = vunpack.c.l.b16 %v2037
      %v2088 = vunpack.c.h.b16 %v2037
      %v2089 = vunpack.c.l.b16 %v2038
      %v2090 = vunpack.c.h.b16 %v2038
      %v2091 = vunpack.c.l.b16 %v2039
      %v2092 = vunpack.c.h.b16 %v2039
      %v2093 = vunpack.c.l.b16 %v2040
      %v2094 = vunpack.c.h.b16 %v2040
      %v2095 = vunpack.c.l.b16 %v2041
      %v2096 = vunpack.c.h.b16 %v2041
      %v2097 = vunpack.c.l.b16 %v2042
      %v2098 = vunpack.c.h.b16 %v2042
      %v2099 = vunpack.c.l.b16 %v2043
      %v2100 = vunpack.c.h.b16 %v2043
      %v2101 = vunpack.c.l.b16 %v2044
      %v2102 = vunpack.c.h.b16 %v2044
      %v2103 = vunpack.c.l.b16 %v2045
      %v2104 = vunpack.c.h.b16 %v2045
      %v2105 = vunpack.c.l.b16 %v2046
      %v2106 = vunpack.c.h.b16 %v2046
      %v2107 = vpack.c.b16 %v2075, %v2071
      %v2108 = vpack.c.b16 %v2076, %v2072
      %v2109 = vpack.c.b16 %v2077, %v2073
      %v2110 = vpack.c.b16 %v2078, %v2074
      %v2111 = vpack.c.b16 %v2083, %v2079
      %v2112 = vpack.c.b16 %v2084, %v2080
      %v2113 = vpack.c.b16 %v2085, %v2081
      %v2114 = vpack.c.b16 %v2086, %v2082
      %v2115 = vpack.c.b16 %v2091, %v2087
      %v2116 = vpack.c.b16 %v2092, %v2088
      %v2117 = vpack.c.b16 %v2093, %v2089
      %v2118 = vpack.c.b16 %v2094, %v2090
      %v2119 = vpack.c.b16 %v2099, %v2095
      %v2120 = vpack.c.b16 %v2100, %v2096
      %v2121 = vpack.c.b16 %v2101, %v2097
      %v2122 = vpack.c.b16 %v2102, %v2098
      %v2123 = vpack.c.b16 %v2103, %v2103
      %v2124 = vpack.c.b16 %v2104, %v2104
      %v2125 = vpack.c.b16 %v2105, %v2105
      %v2126 = vpack.c.b16 %v2106, %v2106
      %v2144 = vsel %vm739, %v2028, 0
      %v2147 = vsel %vm743, %v2123, 0
      %v2150 = vsel %vm743, %v2124, 0
      %v2153 = vsel %vm743, %v2125, 0
      %v2156 = vsel %vm743, %v2126, 0
      %2158 = vmatprep.subr.bf16.mxu0 0
      %2159 = vmatpush1.bf16.msra.mxu0 0
      %2160 = vmatprep.subr.bf16.mxu0 0
      %2161 = vmatpush1.bf16.msra.mxu0 0
      %2162 = vmatprep.subr.bf16.mxu0 0
      %2163 = vmatpush1.bf16.msra.mxu0 0
      %2164 = vmatprep.subr.bf16.mxu0 %v2150
      %2165 = vmatpush1.bf16.msra.mxu0 %v2147
      %2166 = vmatprep.subr.bf16.mxu0 %v2120
      %2167 = vmatpush1.bf16.msra.mxu0 %v2119
      %2168 = vmatprep.subr.bf16.mxu0 %v2116
      %2169 = vmatpush1.bf16.msra.mxu0 %v2115
      %2170 = vmatprep.subr.bf16.mxu0 %v2112
      %2171 = vmatpush1.bf16.msra.mxu0 %v2111
      %2172 = vmatprep.subr.bf16.mxu0 %v2108
      %2173 = vmatpush1.bf16.msra.mxu0 %v2107
      %2174 = vmatprep.subr.bf16.mxu0 0
      %2175 = vmatpush2.bf16.msra.mxu0 0
      %2176 = vmatprep.subr.bf16.mxu0 0
      %2177 = vmatpush2.bf16.msra.mxu0 0
      %2178 = vmatprep.subr.bf16.mxu0 0
      %2179 = vmatpush2.bf16.msra.mxu0 0
      %2180 = vmatprep.subr.bf16.mxu0 0
      %2181 = vmatpush2.bf16.msra.mxu0 0
      %2182 = vmatprep.subr.bf16.mxu0 0
      %2183 = vmatpush2.bf16.msra.mxu0 0
      %2184 = vmatprep.subr.bf16.mxu0 0
      %2185 = vmatpush2.bf16.msra.mxu0 0
      %2186 = vmatprep.subr.bf16.mxu0 0
      %2187 = vmatpush2.bf16.msra.mxu0 0
      %2188 = vmatprep.subr.bf16.mxu0 0
      %2189 = vmatpush2.bf16.msra.mxu0 0
      %2190 = vmatprep.mubr.bf16.mxu0 0
      %2191 = vmatmul.mubr.bf16.gmra.mxu0 %v2144
      %v2192 = vpop.f32.mrf.mxu0
      %v2193 = vadd.f32 %v2051, %v2192
      %v2194 = vpop.f32.mrf.mxu0
      %v2195 = vadd.f32 %v2051, %v2194
      %v2196 = vpop.f32.mrf.mxu0
      %v2197 = vpop.f32.mrf.mxu0
      %2198 = vdwg.mxu0
      %2199 = vmatprep.subr.bf16.mxu0 0
      %2200 = vmatpush1.bf16.msra.mxu0 0
      %2201 = vmatprep.subr.bf16.mxu0 0
      %2202 = vmatpush1.bf16.msra.mxu0 0
      %2203 = vmatprep.subr.bf16.mxu0 0
      %2204 = vmatpush1.bf16.msra.mxu0 0
      %2205 = vmatprep.subr.bf16.mxu0 %v2156
      %2206 = vmatpush1.bf16.msra.mxu0 %v2153
      %2207 = vmatprep.subr.bf16.mxu0 %v2122
      %2208 = vmatpush1.bf16.msra.mxu0 %v2121
      %2209 = vmatprep.subr.bf16.mxu0 %v2118
      %2210 = vmatpush1.bf16.msra.mxu0 %v2117
      %2211 = vmatprep.subr.bf16.mxu0 %v2114
      %2212 = vmatpush1.bf16.msra.mxu0 %v2113
      %2213 = vmatprep.subr.bf16.mxu0 %v2110
      %2214 = vmatpush1.bf16.msra.mxu0 %v2109
      %2215 = vmatprep.subr.bf16.mxu0 0
      %2216 = vmatpush2.bf16.msra.mxu0 0
      %2217 = vmatprep.subr.bf16.mxu0 0
      %2218 = vmatpush2.bf16.msra.mxu0 0
      %2219 = vmatprep.subr.bf16.mxu0 0
      %2220 = vmatpush2.bf16.msra.mxu0 0
      %2221 = vmatprep.subr.bf16.mxu0 0
      %2222 = vmatpush2.bf16.msra.mxu0 0
      %2223 = vmatprep.subr.bf16.mxu0 0
      %2224 = vmatpush2.bf16.msra.mxu0 0
      %2225 = vmatprep.subr.bf16.mxu0 0
      %2226 = vmatpush2.bf16.msra.mxu0 0
      %2227 = vmatprep.subr.bf16.mxu0 0
      %2228 = vmatpush2.bf16.msra.mxu0 0
      %2229 = vmatprep.subr.bf16.mxu0 0
      %2230 = vmatpush2.bf16.msra.mxu0 0
      %2231 = vmatprep.mubr.bf16.mxu0 0
      %2232 = vmatmul.mubr.bf16.gmra.mxu0 %v2144
      %v2233 = vpop.f32.mrf.mxu0
      %v2234 = vadd.f32 %v2051, %v2233
      %v2235 = vpop.f32.mrf.mxu0
      %v2236 = vadd.f32 %v2051, %v2235
      %v2237 = vpop.f32.mrf.mxu0
      %v2238 = vpop.f32.mrf.mxu0
      %2239 = vdwg.mxu0
      %v2240 = vpack.c.bf16 %v2193, %v2193
      %v2241 = vpack.c.bf16 %v2195, %v2195
      %v2242 = vpack.c.bf16 %v2234, %v2234
      %v2243 = vpack.c.bf16 %v2236, %v2236
      %v2248 = vunpack.c.l.b16 %v2240
      %v2249 = vunpack.c.l.b16 %v2241
      %v2250 = vunpack.c.l.b16 %v2242
      %v2251 = vunpack.c.l.b16 %v2243
      %v2252 = vpack.c.b16 %v2249, %v2248
      %v2253 = vpack.c.b16 %v2251, %v2250
      %2256 = vst [vmem:[#allocation4 + $0x20] sm:$0xff] %v2252
      %2257 = vst [vmem:[#allocation4 + $0x28] sm:$0xff] %v2253
      %v2258 = vld [vmem:[%s5] sm:$0xf]
      %v2259 = vld [vmem:[#allocation4] sm:$0xff]
      %v2260 = vld [vmem:[#allocation4 + $0x8] sm:$0xff]
      %v2261 = vld [vmem:[#allocation4 + $0x10] sm:$0xff]
      %v2262 = vld [vmem:[#allocation4 + $0x18] sm:$0xff]
      %v2263 = vld [vmem:[#allocation4 + $0x20] sm:$0xff]
      %v2264 = vld [vmem:[#allocation4 + $0x28] sm:$0xff]
      %v2265 = vld [vmem:[%s9] sm:$0xff]
      %2267 = vset.pattern.permute.xlu0 0
      %2268 = vperm.xlu0 %2267, %v2265
      %v2269 = vpop.permute.xlu0 %2268
      %v2277 = vunpack.c.l.b16 %v2259
      %v2278 = vunpack.c.h.b16 %v2259
      %v2279 = vunpack.c.l.b16 %v2260
      %v2280 = vunpack.c.h.b16 %v2260
      %v2281 = vunpack.c.l.b16 %v2261
      %v2282 = vunpack.c.h.b16 %v2261
      %v2283 = vunpack.c.l.b16 %v2262
      %v2284 = vunpack.c.h.b16 %v2262
      %v2285 = vunpack.c.l.b16 %v2263
      %v2286 = vunpack.c.h.b16 %v2263
      %v2287 = vunpack.c.l.b16 %v2264
      %v2288 = vunpack.c.h.b16 %v2264
      %v2289 = vpack.c.b16 %v2277, %v2277
      %v2290 = vpack.c.b16 %v2278, %v2278
      %v2291 = vpack.c.b16 %v2279, %v2279
      %v2292 = vpack.c.b16 %v2280, %v2280
      %v2293 = vpack.c.b16 %v2281, %v2281
      %v2294 = vpack.c.b16 %v2282, %v2282
      %v2295 = vpack.c.b16 %v2283, %v2283
      %v2296 = vpack.c.b16 %v2284, %v2284
      %v2297 = vpack.c.b16 %v2285, %v2285
      %v2298 = vpack.c.b16 %v2286, %v2286
      %v2299 = vpack.c.b16 %v2287, %v2287
      %v2300 = vpack.c.b16 %v2288, %v2288
      %vm2301 = vcmask 64512
      %v2303 = vsel %vm2301, %v2258, 0
      %v2306 = vsel %vm743, %v2289, 0
      %v2309 = vsel %vm743, %v2290, 0
      %v2312 = vsel %vm743, %v2291, 0
      %v2315 = vsel %vm743, %v2292, 0
      %v2318 = vsel %vm743, %v2293, 0
      %v2321 = vsel %vm743, %v2294, 0
      %v2324 = vsel %vm743, %v2295, 0
      %v2327 = vsel %vm743, %v2296, 0
      %v2330 = vsel %vm743, %v2297, 0
      %v2333 = vsel %vm743, %v2298, 0
      %v2336 = vsel %vm743, %v2299, 0
      %v2339 = vsel %vm743, %v2300, 0
      %2341 = vmatprep.subr.bf16.mxu0 0
      %2342 = vmatpush1.bf16.msra.mxu0 0
      %2343 = vmatprep.subr.bf16.mxu0 0
      %2344 = vmatpush1.bf16.msra.mxu0 0
      %2345 = vmatprep.subr.bf16.mxu0 0
      %2346 = vmatpush1.bf16.msra.mxu0 0
      %2347 = vmatprep.subr.bf16.mxu0 0
      %2348 = vmatpush1.bf16.msra.mxu0 0
      %2349 = vmatprep.subr.bf16.mxu0 0
      %2350 = vmatpush1.bf16.msra.mxu0 0
      %2351 = vmatprep.subr.bf16.mxu0 0
      %2352 = vmatpush1.bf16.msra.mxu0 0
      %2353 = vmatprep.subr.bf16.mxu0 0
      %2354 = vmatpush1.bf16.msra.mxu0 0
      %2355 = vmatprep.subr.bf16.mxu0 %v2309
      %2356 = vmatpush1.bf16.msra.mxu0 %v2306
      %2357 = vmatprep.subr.bf16.mxu0 0
      %2358 = vmatpush2.bf16.msra.mxu0 0
      %2359 = vmatprep.subr.bf16.mxu0 0
      %2360 = vmatpush2.bf16.msra.mxu0 0
      %2361 = vmatprep.subr.bf16.mxu0 0
      %2362 = vmatpush2.bf16.msra.mxu0 0
      %2363 = vmatprep.subr.bf16.mxu0 0
      %2364 = vmatpush2.bf16.msra.mxu0 0
      %2365 = vmatprep.subr.bf16.mxu0 0
      %2366 = vmatpush2.bf16.msra.mxu0 0
      %2367 = vmatprep.subr.bf16.mxu0 0
      %2368 = vmatpush2.bf16.msra.mxu0 0
      %2369 = vmatprep.subr.bf16.mxu0 0
      %2370 = vmatpush2.bf16.msra.mxu0 0
      %2371 = vmatprep.subr.bf16.mxu0 0
      %2372 = vmatpush2.bf16.msra.mxu0 0
      %2373 = vmatprep.mubr.bf16.mxu0 0
      %2374 = vmatmul.mubr.bf16.gmra.mxu0 %v2303
      %v2375 = vpop.f32.mrf.mxu0
      %v2376 = vadd.f32 %v2269, %v2375
      %v2377 = vpop.f32.mrf.mxu0
      %v2378 = vadd.f32 %v2269, %v2377
      %v2379 = vpop.f32.mrf.mxu0
      %v2380 = vpop.f32.mrf.mxu0
      %2381 = vdwg.mxu0
      %2382 = vmatprep.subr.bf16.mxu0 0
      %2383 = vmatpush1.bf16.msra.mxu0 0
      %2384 = vmatprep.subr.bf16.mxu0 0
      %2385 = vmatpush1.bf16.msra.mxu0 0
      %2386 = vmatprep.subr.bf16.mxu0 0
      %2387 = vmatpush1.bf16.msra.mxu0 0
      %2388 = vmatprep.subr.bf16.mxu0 0
      %2389 = vmatpush1.bf16.msra.mxu0 0
      %2390 = vmatprep.subr.bf16.mxu0 0
      %2391 = vmatpush1.bf16.msra.mxu0 0
      %2392 = vmatprep.subr.bf16.mxu0 0
      %2393 = vmatpush1.bf16.msra.mxu0 0
      %2394 = vmatprep.subr.bf16.mxu0 0
      %2395 = vmatpush1.bf16.msra.mxu0 0
      %2396 = vmatprep.subr.bf16.mxu0 %v2315
      %2397 = vmatpush1.bf16.msra.mxu0 %v2312
      %2398 = vmatprep.subr.bf16.mxu0 0
      %2399 = vmatpush2.bf16.msra.mxu0 0
      %2400 = vmatprep.subr.bf16.mxu0 0
      %2401 = vmatpush2.bf16.msra.mxu0 0
      %2402 = vmatprep.subr.bf16.mxu0 0
      %2403 = vmatpush2.bf16.msra.mxu0 0
      %2404 = vmatprep.subr.bf16.mxu0 0
      %2405 = vmatpush2.bf16.msra.mxu0 0
      %2406 = vmatprep.subr.bf16.mxu0 0
      %2407 = vmatpush2.bf16.msra.mxu0 0
      %2408 = vmatprep.subr.bf16.mxu0 0
      %2409 = vmatpush2.bf16.msra.mxu0 0
      %2410 = vmatprep.subr.bf16.mxu0 0
      %2411 = vmatpush2.bf16.msra.mxu0 0
      %2412 = vmatprep.subr.bf16.mxu0 0
      %2413 = vmatpush2.bf16.msra.mxu0 0
      %2414 = vmatprep.mubr.bf16.mxu0 0
      %2415 = vmatmul.mubr.bf16.gmra.mxu0 %v2303
      %v2416 = vpop.f32.mrf.mxu0
      %v2417 = vadd.f32 %v2269, %v2416
      %v2418 = vpop.f32.mrf.mxu0
      %v2419 = vadd.f32 %v2269, %v2418
      %v2420 = vpop.f32.mrf.mxu0
      %v2421 = vpop.f32.mrf.mxu0
      %2422 = vdwg.mxu0
      %2423 = vmatprep.subr.bf16.mxu0 0
      %2424 = vmatpush1.bf16.msra.mxu0 0
      %2425 = vmatprep.subr.bf16.mxu0 0
      %2426 = vmatpush1.bf16.msra.mxu0 0
      %2427 = vmatprep.subr.bf16.mxu0 0
      %2428 = vmatpush1.bf16.msra.mxu0 0
      %2429 = vmatprep.subr.bf16.mxu0 0
      %2430 = vmatpush1.bf16.msra.mxu0 0
      %2431 = vmatprep.subr.bf16.mxu0 0
      %2432 = vmatpush1.bf16.msra.mxu0 0
      %2433 = vmatprep.subr.bf16.mxu0 0
      %2434 = vmatpush1.bf16.msra.mxu0 0
      %2435 = vmatprep.subr.bf16.mxu0 0
      %2436 = vmatpush1.bf16.msra.mxu0 0
      %2437 = vmatprep.subr.bf16.mxu0 %v2321
      %2438 = vmatpush1.bf16.msra.mxu0 %v2318
      %2439 = vmatprep.subr.bf16.mxu0 0
      %2440 = vmatpush2.bf16.msra.mxu0 0
      %2441 = vmatprep.subr.bf16.mxu0 0
      %2442 = vmatpush2.bf16.msra.mxu0 0
      %2443 = vmatprep.subr.bf16.mxu0 0
      %2444 = vmatpush2.bf16.msra.mxu0 0
      %2445 = vmatprep.subr.bf16.mxu0 0
      %2446 = vmatpush2.bf16.msra.mxu0 0
      %2447 = vmatprep.subr.bf16.mxu0 0
      %2448 = vmatpush2.bf16.msra.mxu0 0
      %2449 = vmatprep.subr.bf16.mxu0 0
      %2450 = vmatpush2.bf16.msra.mxu0 0
      %2451 = vmatprep.subr.bf16.mxu0 0
      %2452 = vmatpush2.bf16.msra.mxu0 0
      %2453 = vmatprep.subr.bf16.mxu0 0
      %2454 = vmatpush2.bf16.msra.mxu0 0
      %2455 = vmatprep.mubr.bf16.mxu0 0
      %2456 = vmatmul.mubr.bf16.gmra.mxu0 %v2303
      %v2457 = vpop.f32.mrf.mxu0
      %v2458 = vadd.f32 %v2269, %v2457
      %v2459 = vpop.f32.mrf.mxu0
      %v2460 = vadd.f32 %v2269, %v2459
      %v2461 = vpop.f32.mrf.mxu0
      %v2462 = vpop.f32.mrf.mxu0
      %2463 = vdwg.mxu0
      %2464 = vmatprep.subr.bf16.mxu0 0
      %2465 = vmatpush1.bf16.msra.mxu0 0
      %2466 = vmatprep.subr.bf16.mxu0 0
      %2467 = vmatpush1.bf16.msra.mxu0 0
      %2468 = vmatprep.subr.bf16.mxu0 0
      %2469 = vmatpush1.bf16.msra.mxu0 0
      %2470 = vmatprep.subr.bf16.mxu0 0
      %2471 = vmatpush1.bf16.msra.mxu0 0
      %2472 = vmatprep.subr.bf16.mxu0 0
      %2473 = vmatpush1.bf16.msra.mxu0 0
      %2474 = vmatprep.subr.bf16.mxu0 0
      %2475 = vmatpush1.bf16.msra.mxu0 0
      %2476 = vmatprep.subr.bf16.mxu0 0
      %2477 = vmatpush1.bf16.msra.mxu0 0
      %2478 = vmatprep.subr.bf16.mxu0 %v2327
      %2479 = vmatpush1.bf16.msra.mxu0 %v2324
      %2480 = vmatprep.subr.bf16.mxu0 0
      %2481 = vmatpush2.bf16.msra.mxu0 0
      %2482 = vmatprep.subr.bf16.mxu0 0
      %2483 = vmatpush2.bf16.msra.mxu0 0
      %2484 = vmatprep.subr.bf16.mxu0 0
      %2485 = vmatpush2.bf16.msra.mxu0 0
      %2486 = vmatprep.subr.bf16.mxu0 0
      %2487 = vmatpush2.bf16.msra.mxu0 0
      %2488 = vmatprep.subr.bf16.mxu0 0
      %2489 = vmatpush2.bf16.msra.mxu0 0
      %2490 = vmatprep.subr.bf16.mxu0 0
      %2491 = vmatpush2.bf16.msra.mxu0 0
      %2492 = vmatprep.subr.bf16.mxu0 0
      %2493 = vmatpush2.bf16.msra.mxu0 0
      %2494 = vmatprep.subr.bf16.mxu0 0
      %2495 = vmatpush2.bf16.msra.mxu0 0
      %2496 = vmatprep.mubr.bf16.mxu0 0
      %2497 = vmatmul.mubr.bf16.gmra.mxu0 %v2303
      %v2498 = vpop.f32.mrf.mxu0
      %v2499 = vadd.f32 %v2269, %v2498
      %v2500 = vpop.f32.mrf.mxu0
      %v2501 = vadd.f32 %v2269, %v2500
      %v2502 = vpop.f32.mrf.mxu0
      %v2503 = vpop.f32.mrf.mxu0
      %2504 = vdwg.mxu0
      %2505 = vmatprep.subr.bf16.mxu0 0
      %2506 = vmatpush1.bf16.msra.mxu0 0
      %2507 = vmatprep.subr.bf16.mxu0 0
      %2508 = vmatpush1.bf16.msra.mxu0 0
      %2509 = vmatprep.subr.bf16.mxu0 0
      %2510 = vmatpush1.bf16.msra.mxu0 0
      %2511 = vmatprep.subr.bf16.mxu0 0
      %2512 = vmatpush1.bf16.msra.mxu0 0
      %2513 = vmatprep.subr.bf16.mxu0 0
      %2514 = vmatpush1.bf16.msra.mxu0 0
      %2515 = vmatprep.subr.bf16.mxu0 0
      %2516 = vmatpush1.bf16.msra.mxu0 0
      %2517 = vmatprep.subr.bf16.mxu0 0
      %2518 = vmatpush1.bf16.msra.mxu0 0
      %2519 = vmatprep.subr.bf16.mxu0 %v2333
      %2520 = vmatpush1.bf16.msra.mxu0 %v2330
      %2521 = vmatprep.subr.bf16.mxu0 0
      %2522 = vmatpush2.bf16.msra.mxu0 0
      %2523 = vmatprep.subr.bf16.mxu0 0
      %2524 = vmatpush2.bf16.msra.mxu0 0
      %2525 = vmatprep.subr.bf16.mxu0 0
      %2526 = vmatpush2.bf16.msra.mxu0 0
      %2527 = vmatprep.subr.bf16.mxu0 0
      %2528 = vmatpush2.bf16.msra.mxu0 0
      %2529 = vmatprep.subr.bf16.mxu0 0
      %2530 = vmatpush2.bf16.msra.mxu0 0
      %2531 = vmatprep.subr.bf16.mxu0 0
      %2532 = vmatpush2.bf16.msra.mxu0 0
      %2533 = vmatprep.subr.bf16.mxu0 0
      %2534 = vmatpush2.bf16.msra.mxu0 0
      %2535 = vmatprep.subr.bf16.mxu0 0
      %2536 = vmatpush2.bf16.msra.mxu0 0
      %2537 = vmatprep.mubr.bf16.mxu0 0
      %2538 = vmatmul.mubr.bf16.gmra.mxu0 %v2303
      %v2539 = vpop.f32.mrf.mxu0
      %v2540 = vadd.f32 %v2269, %v2539
      %v2541 = vpop.f32.mrf.mxu0
      %v2542 = vadd.f32 %v2269, %v2541
      %v2543 = vpop.f32.mrf.mxu0
      %v2544 = vpop.f32.mrf.mxu0
      %2545 = vdwg.mxu0
      %2546 = vmatprep.subr.bf16.mxu0 0
      %2547 = vmatpush1.bf16.msra.mxu0 0
      %2548 = vmatprep.subr.bf16.mxu0 0
      %2549 = vmatpush1.bf16.msra.mxu0 0
      %2550 = vmatprep.subr.bf16.mxu0 0
      %2551 = vmatpush1.bf16.msra.mxu0 0
      %2552 = vmatprep.subr.bf16.mxu0 0
      %2553 = vmatpush1.bf16.msra.mxu0 0
      %2554 = vmatprep.subr.bf16.mxu0 0
      %2555 = vmatpush1.bf16.msra.mxu0 0
      %2556 = vmatprep.subr.bf16.mxu0 0
      %2557 = vmatpush1.bf16.msra.mxu0 0
      %2558 = vmatprep.subr.bf16.mxu0 0
      %2559 = vmatpush1.bf16.msra.mxu0 0
      %2560 = vmatprep.subr.bf16.mxu0 %v2339
      %2561 = vmatpush1.bf16.msra.mxu0 %v2336
      %2562 = vmatprep.subr.bf16.mxu0 0
      %2563 = vmatpush2.bf16.msra.mxu0 0
      %2564 = vmatprep.subr.bf16.mxu0 0
      %2565 = vmatpush2.bf16.msra.mxu0 0
      %2566 = vmatprep.subr.bf16.mxu0 0
      %2567 = vmatpush2.bf16.msra.mxu0 0
      %2568 = vmatprep.subr.bf16.mxu0 0
      %2569 = vmatpush2.bf16.msra.mxu0 0
      %2570 = vmatprep.subr.bf16.mxu0 0
      %2571 = vmatpush2.bf16.msra.mxu0 0
      %2572 = vmatprep.subr.bf16.mxu0 0
      %2573 = vmatpush2.bf16.msra.mxu0 0
      %2574 = vmatprep.subr.bf16.mxu0 0
      %2575 = vmatpush2.bf16.msra.mxu0 0
      %2576 = vmatprep.subr.bf16.mxu0 0
      %2577 = vmatpush2.bf16.msra.mxu0 0
      %2578 = vmatprep.mubr.bf16.mxu0 0
      %2579 = vmatmul.mubr.bf16.gmra.mxu0 %v2303
      %v2580 = vpop.f32.mrf.mxu0
      %v2581 = vadd.f32 %v2269, %v2580
      %v2582 = vpop.f32.mrf.mxu0
      %v2583 = vadd.f32 %v2269, %v2582
      %v2584 = vpop.f32.mrf.mxu0
      %v2585 = vpop.f32.mrf.mxu0
      %2586 = vdwg.mxu0
      %v2587 = vmax.f32 %v2376, 0.0
      %v2588 = vmax.f32 %v2378, 0.0
      %v2589 = vmax.f32 %v2417, 0.0
      %v2590 = vmax.f32 %v2419, 0.0
      %v2591 = vmax.f32 %v2458, 0.0
      %v2592 = vmax.f32 %v2460, 0.0
      %v2593 = vmax.f32 %v2499, 0.0
      %v2594 = vmax.f32 %v2501, 0.0
      %v2595 = vmax.f32 %v2540, 0.0
      %v2596 = vmax.f32 %v2542, 0.0
      %v2597 = vmax.f32 %v2581, 0.0
      %v2598 = vmax.f32 %v2583, 0.0
      %v2599 = vadd.f32 %v1287, %v2587
      %v2600 = vadd.f32 %v1288, %v2588
      %v2601 = vadd.f32 %v1289, %v2589
      %v2602 = vadd.f32 %v1290, %v2590
      %v2603 = vadd.f32 %v2599, %v2591
      %v2604 = vadd.f32 %v2600, %v2592
      %v2605 = vadd.f32 %v2601, %v2593
      %v2606 = vadd.f32 %v2602, %v2594
      %v2607 = vadd.f32 %v2603, %v2595
      %v2608 = vadd.f32 %v2604, %v2596
      %v2609 = vadd.f32 %v2605, %v2597
      %v2610 = vadd.f32 %v2606, %v2598
      %2611 = vst [vmem:[%s359] sm:$0xff] %v2607
      %2612 = vst [vmem:[%s359 + $0x8] sm:$0xff] %v2608
      %2613 = vst [vmem:[%s359 + $0x10] sm:$0xff] %v2609
      %2614 = vst [vmem:[%s359 + $0x18] sm:$0xff] %v2610
      %p2615 = scmp.lt.s32.totalorder %s21, 1
      %s2616 = scalar_select %p2615, %s21, 1
      %s2617 = smul.addr %s2616, 4
      %s2618 = smul.addr %s2617, 8
      %s2619 = scalar_lea.vmem %s10, %s2618
      // Predicated region
      $region61: #{dac_block.1} parent=59 // pred_check
        %p2620 = pneg %p254
      $region62: #{dac_block.1} parent=59 // pred_check_branch
        %2622 = sbr.rel (%p2620) target = $region64
      $region63: #{dac_block.1} parent=59 // pred_region
        _
      $region64: #{dac_block.1} parent=59 // pred_fallthru
        _
    $region60: #{dac_block.1} parent=5 // pred_fallthru
      _
    %p2623 = scmp.le.s32.totalorder 2, %s16
    // Predicated region
    $region65: #{dac_block.1} parent=5 // pred_check
      %p2624 = pneg %p2623
    $region66: #{dac_block.1} parent=5 // pred_check_branch
      %2626 = sbr.rel (%p2624) target = $region68
    $region67: #{dac_block.1} parent=5 // pred_region
      %s2627 = ssub.s32 %s16, 2
      // Predicated region
      $region69: #{dac_block.1} parent=67 // pred_check
        %p2628 = pneg %p260
      $region70: #{dac_block.1} parent=67 // pred_check_branch
        %2630 = sbr.rel (%p2628) target = $region72
      $region71: #{dac_block.1} parent=67 // pred_region
        %p2631 = scmp.lt.s32.totalorder %s22, 1
        %s2632 = scalar_select %p2631, %s22, 1
        %s2633 = smul.addr %s2632, 4
        %s2634 = smul.addr %s2633, 8
        %s2635 = scalar_lea.vmem %s10, %s2634
      $region72: #{dac_block.1} parent=67 // pred_fallthru
        _
    $region68: #{dac_block.1} parent=5 // pred_fallthru
      _
  $region6: #{dac_block.1} parent=0 // loop_footer
    %s20 = sadd.s32 1, %s16
  $region7: #{dac_block.1} parent=0 // loop_footer_branch
    %15 = sbr.rel target = $region3
  $region8: #{dac_block.1} parent=0 // loop_exit
    _

</llo_original>
